<compile_context>
chip_gen: v6e
topology: v6e:2x2x1
jax: 0.10.0
libtpu: 0.0.40
codegen_flags: <defaults>
</compile_context>

<pallas_src>
import numpy as np
import jax
import jax.numpy as jnp
from jax.experimental import pallas as pl
from jax.experimental.pallas import tpu as pltpu


# Four extra lanes appended after the subword lanes carry the scalar spans:
#   [-4] total softmax mass (all-ones span)  -> softmax denominator l
#   [-3] node wids span                      -> sum_prob (full span when wids is None)
#   [-2] <unk> span                          -> unk_prob
#   [-1] node wid span                       -> wlm_prob (empty span when wid < 0)
_N_EXTRA = 4
_VMEM_BUDGET = 40 * 1024 * 1024     # tile-sizing budget (safe under v7x's 64 MiB VMEM/TC)
_VMEM_LIMIT = 48 * 1024 * 1024


# ----------------------------------------------------------------------------------
# helpers
# ----------------------------------------------------------------------------------
def _round_up(x, m):
    return ((x + m - 1) // m) * m


def _pick_tile(v, per_tile_bytes, budget=_VMEM_BUDGET, cap=8192):
    cands = sorted({t for t in (v, 8192, 4096, 2048, 1024, 512, 256, 128)
                    if t <= min(v, cap) and v % t == 0 and t % 128 == 0}, reverse=True)
    if not cands:
        raise ValueError("word vocab size must be a multiple of 128, got %d" % v)
    for t in cands:
        if per_tile_bytes(t) <= budget:
            return t
    return cands[-1]


# ----------------------------------------------------------------------------------
# shared in-kernel accumulation (online softmax + folded span sums)
# ----------------------------------------------------------------------------------
def _acc_update(k, v_tile, z, lo_ref, hi_ref, acc_scr, m_scr):
    """Online-softmax span accumulation: one bf16 mask matmul per beam per vocab tile.

    Span semantics match the reference cumsum[hi] - cumsum[lo]: sum of softmax(z) over (lo, hi].
    """
    nb = z.shape[0]
    w = lo_ref.shape[-1]
    base = k * v_tile
    m_prev = m_scr[...]                                              # (B, 1)
    m_new = jnp.maximum(m_prev, jnp.max(z, axis=-1, keepdims=True))
    alpha = jnp.exp(m_prev - m_new)                                  # rescale old accumulators
    p = jnp.exp(z - m_new).astype(jnp.bfloat16)                      # (B, TV) unnorm. probs

    # tile-local word index; tile offset folded into the small (B, W) lo/hi vectors instead
    # of the big (TV, W) iota (saves ~TV*W/1024 int32 vreg adds per tile).
    col = jax.lax.broadcasted_iota(jnp.int32, (v_tile, w), 0)        # (TV, W)
    lo_s = lo_ref[...] - base
    hi_s = hi_ref[...] - base

    rows = []
    for b in range(nb):                                              # nb is a trace-time const
        lo_b = lo_s if nb == 1 else lo_s[b:b + 1, :]
        hi_b = hi_s if nb == 1 else hi_s[b:b + 1, :]
        p_b = p if nb == 1 else p[b:b + 1, :]
        cmat = jnp.logical_and(col > lo_b, col <= hi_b).astype(jnp.bfloat16)   # (TV, W)
        rows.append(jnp.dot(p_b, cmat, preferred_element_type=jnp.float32))    # (1, W)
    spans = rows[0] if nb == 1 else jnp.concatenate(rows, axis=0)               # (B, W)

    acc_scr[...] = alpha * acc_scr[...] + spans
    m_scr[...] = m_new


def _acc_finalize(cm_ref, wm_ref, zm_ref, logy_ref, acc_scr, oov_penalty, zero, logzero):
    w = acc_scr.shape[-1]
    acc = acc_scr[...]                                               # (B, W)
    l = acc[:, w - 4:w - 3]                                          # softmax denominator
    s_sum = acc[:, w - 3:w - 2]                                      # node wids span
    s_unk = acc[:, w - 2:w - 1]                                      # <unk> span
    s_wid = acc[:, w - 1:w]                                          # node wid span

    # finalize runs once per token -> exact reciprocals (approx error would land in log-probs)
    inv_l = 1.0 / l
    sum_prob = s_sum * inv_l                                         # == 1.0 when wids is None
    scale = inv_l / sum_prob
    unk_prob = s_unk * inv_l
    wlm_prob = s_wid * scale
    child_prob = acc * scale

    y = jnp.where(cm_ref[...] > 0.5, child_prob, unk_prob * oov_penalty)
    y = jnp.where(wm_ref[...] > 0.5, wlm_prob, y)                    # wid >= 0 case
    y = jnp.where(zm_ref[...] > 0.5, zero, y)                        # xi == space case
    log_y = jnp.log(jnp.maximum(y, zero))
    # "sum_prob < zero -> full logzero" early exit expressed as a select
    logy_ref[...] = jnp.where(sum_prob < zero, logzero, log_y)


# ----------------------------------------------------------------------------------
# kernels
# ----------------------------------------------------------------------------------
def _make_fused_step_kernel(v_tile, oov_penalty, zero, logzero):
    """Word-LM step (tanh RNN) + streamed-who logits + span accumulation + look-ahead finalize."""
    def kernel(xemb_ref, h_ref, wih_ref, whh_ref, bh_ref, who_ref, bo_ref,
               lo_ref, hi_ref, cm_ref, wm_ref, zm_ref,
               hout_ref, z_out_ref, logy_ref,
               hscr, acc_scr, m_scr):
        k = pl.program_id(0)

        @pl.when(k == 0)
        def _init():
            pre = (jnp.dot(xemb_ref[...], wih_ref[...],
                           preferred_element_type=jnp.float32)
                   + jnp.dot(h_ref[...].astype(jnp.bfloat16), whh_ref[...],
                             preferred_element_type=jnp.float32)
                   + bh_ref[...])
            h_new = jnp.tanh(pre)                                    # (B, H) f32
            hscr[...] = h_new
            hout_ref[...] = h_new
            acc_scr[...] = jnp.zeros_like(acc_scr)
            m_scr[...] = jnp.full_like(m_scr, -1e30)

        # logits for this vocab tile (bf16 weights on the MXU, f32 accumulation)
        z = (jnp.dot(hscr[...].astype(jnp.bfloat16), who_ref[...],
                     preferred_element_type=jnp.float32) + bo_ref[...])
        z_out_ref[...] = z
        _acc_update(k, v_tile, z, lo_ref, hi_ref, acc_scr, m_scr)

        @pl.when(k == pl.num_programs(0) - 1)
        def _fin():
            _acc_finalize(cm_ref, wm_ref, zm_ref, logy_ref, acc_scr,
                          oov_penalty, zero, logzero)
    return kernel


def _make_lookahead_kernel(v_tile, oov_penalty, zero, logzero):
    """Tree-descend path: look-ahead from stored logits, no weight streaming."""
    def kernel(z_ref, lo_ref, hi_ref, cm_ref, wm_ref, zm_ref, logy_ref,
               acc_scr, m_scr):
        k = pl.program_id(0)

        @pl.when(k == 0)
        def _init():
            acc_scr[...] = jnp.zeros_like(acc_scr)
            m_scr[...] = jnp.full_like(m_scr, -1e30)

        _acc_update(k, v_tile, z_ref[...], lo_ref, hi_ref, acc_scr, m_scr)

        @pl.when(k == pl.num_programs(0) - 1)
        def _fin():
            _acc_finalize(cm_ref, wm_ref, zm_ref, logy_ref, acc_scr,
                          oov_penalty, zero, logzero)
    return kernel


# ----------------------------------------------------------------------------------
# host-side lexical tree (same structure as espnet/eteh make_lexical_tree)
# ----------------------------------------------------------------------------------
def make_lexical_tree(word_dict, subword_dict, word_unk, lexicon=None):
    # node = [ {subword_id: child_node}, word_id, (lo, hi) probability span ]
    root = [{}, -1, None]
    for w, wid in word_dict.items():
        if wid > 0 and wid != word_unk:
            if any(c not in subword_dict for c in w):
                continue
            succ = root[0]
            for i, c in enumerate(w):
                cid = subword_dict[c]
                if cid not in succ:
                    succ[cid] = [{}, -1, (wid - 1, wid)]
                else:
                    prev = succ[cid][2]
                    succ[cid][2] = (min(prev[0], wid - 1), max(prev[1], wid))
                if i == len(w) - 1:
                    succ[cid][1] = wid
                succ = succ[cid][0]
    return root


# ----------------------------------------------------------------------------------
# LookAheadWordLM (JAX / Pallas version)
# ----------------------------------------------------------------------------------
class LookAheadWordLMJax:
    logzero = -10000000000.0
    zero = 1e-10

    def __init__(self, params, word_dict, subword_dict, oov_penalty=0.0001,
                 open_vocab=True, lexicon=None, word_eos="<eos>", word_unk="<unk>",
                 space="<space>", subword_eos="<eos>", subword_unk="<unk>"):
        self.params = params
        self.word_eos = word_dict[word_eos]
        self.word_unk = word_dict[word_unk]
        self.var_word_eos = self.word_eos
        self.var_word_unk = self.word_unk
        self.space = subword_dict[space]
        self.eos = subword_dict[subword_eos]
        self.lexroot = make_lexical_tree(word_dict, subword_dict, self.word_unk, lexicon)
        self.oov_penalty = oov_penalty
        self.open_vocab = open_vocab
        self.subword_dict_size = len(subword_dict) + 1
        self.lexicon = lexicon
        self.new_word_label = [self.space]
        for subword in subword_dict:
            if subword.startswith(space):
                self.new_word_label.append(subword_dict[subword])

        self.hidden = params["wih"].shape[0]
        self.word_vocab = params["who"].shape[1]
        assert self.word_vocab % 128 == 0, "word vocab must be lane-aligned (multiple of 128)"
        # lane-dense width: subword lanes + 4 scalar-span lanes, rounded up to 128
        self.spad = _round_up(self.subword_dict_size + _N_EXTRA, 128)

        self._step_cache = {}
        self._look = self._build_look()

    # ---------------- tile sizing (VMEM-budget driven) -----------------------------
    def _step_tile(self, nbeam):
        H, W = self.hidden, self.spad
        def need(t):
            return (2 * H * t * 2            # double-buffered who tile (bf16)
                    + 2 * t * 4              # bo tile
                    + 2 * nbeam * t * 4      # z_out tile
                    + nbeam * t * W * 2      # in-kernel bf16 span mask
                    + t * W * 4              # int32 tile-index iota
                    + 2 * nbeam * t * 4      # z / p working values
                    + 4 * H * H * 2          # wih + whh residents (double buffered)
                    + 16 * nbeam * (H + W) * 4)
        return _pick_tile(self.word_vocab, need)

    def _look_tile(self):
        W = self.spad
        def need(t):
            return 2 * t * 4 + t * W * 2 + t * W * 4 + 4 * t * 4 + 16 * W * 4
        return _pick_tile(self.word_vocab, need)

    # ---------------- jitted pallas wrappers (one dispatch per decode step) --------
    def _build_step(self, nbeam):
        H, V, W, S = self.hidden, self.word_vocab, self.spad, self.subword_dict_size
        B = nbeam
        TV = self._step_tile(B)
        kern = _make_fused_step_kernel(TV, self.oov_penalty, self.zero, self.logzero)
        full = lambda k: (0, 0)
        tile = lambda k: (0, k)

        call = pl.pallas_call(
            kern,
            out_shape=(jax.ShapeDtypeStruct((B, H), jnp.float32),
                       jax.ShapeDtypeStruct((B, V), jnp.float32),
                       jax.ShapeDtypeStruct((B, W), jnp.float32)),
            grid_spec=pltpu.PrefetchScalarGridSpec(
                num_scalar_prefetch=0,
                grid=(V // TV,),
                in_specs=[
                    pl.BlockSpec((B, H), full),      # xemb (bf16)
                    pl.BlockSpec((B, H), full),      # h
                    pl.BlockSpec((H, H), full),      # wih (bf16)
                    pl.BlockSpec((H, H), full),      # whh (bf16)
                    pl.BlockSpec((1, H), full),      # bh
                    pl.BlockSpec((H, TV), tile),     # who tile (bf16), streamed
                    pl.BlockSpec((1, TV), tile),     # bo tile
                    pl.BlockSpec((B, W), full),      # span lo (child + scalar lanes)
                    pl.BlockSpec((B, W), full),      # span hi
                    pl.BlockSpec((B, W), full),      # child mask
                    pl.BlockSpec((B, W), full),      # wid mask
                    pl.BlockSpec((B, W), full),      # zero mask
                ],
                out_specs=(pl.BlockSpec((B, H), full),
                           pl.BlockSpec((B, TV), tile),
                           pl.BlockSpec((B, W), full)),
                scratch_shapes=[
                    pltpu.VMEM((B, H), jnp.float32),   # h_new, resident across vocab tiles
                    pltpu.VMEM((B, W), jnp.float32),   # span accumulators (folded scalars)
                    pltpu.VMEM((B, 1), jnp.float32),   # running max
                ]),
            compiler_params=pltpu.CompilerParams(
                dimension_semantics=("arbitrary",),
                vmem_limit_bytes=_VMEM_LIMIT))

        def step(word_ids, h, emb, wih, whh, bh, who, bo, lo, hi, cm, wm, zm):
            xemb = jnp.take(emb, word_ids, axis=0)       # (B, H) bf16, fused into the dispatch
            h_new, z, logy = call(xemb, h, wih, whh, bh, who, bo, lo, hi, cm, wm, zm)
            return h_new, z, logy[:, :S]
        return jax.jit(step)

    def _get_step(self, nbeam):
        if nbeam not in self._step_cache:
            self._step_cache[nbeam] = self._build_step(nbeam)
        return self._step_cache[nbeam]

    def _build_look(self):
        V, W, S = self.word_vocab, self.spad, self.subword_dict_size
        TV = self._look_tile()
        kern = _make_lookahead_kernel(TV, self.oov_penalty, self.zero, self.logzero)
        full = lambda k: (0, 0)
        tile = lambda k: (0, k)

        call = pl.pallas_call(
            kern,
            out_shape=jax.ShapeDtypeStruct((1, W), jnp.float32),
            grid_spec=pltpu.PrefetchScalarGridSpec(
                num_scalar_prefetch=0,
                grid=(V // TV,),
                in_specs=[pl.BlockSpec((1, TV), tile)]
                         + [pl.BlockSpec((1, W), full)] * 5,
                out_specs=pl.BlockSpec((1, W), full),
                scratch_shapes=[pltpu.VMEM((1, W), jnp.float32),
                                pltpu.VMEM((1, 1), jnp.float32)]),
            compiler_params=pltpu.CompilerParams(
                dimension_semantics=("arbitrary",),
                vmem_limit_bytes=_VMEM_LIMIT))

        def look(z, lo, hi, cm, wm, zm):
            return call(z, lo, hi, cm, wm, zm)[:, :S]
        return jax.jit(look)

    # ---------------- host glue: per-node span / mask vectors ----------------------
    def _lookahead_inputs(self, new_node, xi):
        succ, wid, wids = new_node
        W, V = self.spad, self.word_vocab
        lo = np.zeros((1, W), np.int32)
        hi = np.full((1, W), -1, np.int32)           # default: empty span -> always 0
        cmask = np.zeros((1, W), np.float32)
        wmask = np.zeros((1, W), np.float32)
        zmask = np.zeros((1, W), np.float32)
        for cid, nd in succ.items():
            lo[0, cid], hi[0, cid] = nd[2]
            cmask[0, cid] = 1.0
        # scalar-span lanes (consumed by _acc_finalize)
        lo[0, W - 4], hi[0, W - 4] = -1, V - 1       # total softmax mass
        if wids is not None:
            lo[0, W - 3], hi[0, W - 3] = wids[0], wids[1]
        else:
            lo[0, W - 3], hi[0, W - 3] = -1, V - 1   # full span -> sum_prob == 1.0
        lo[0, W - 2], hi[0, W - 2] = self.word_unk - 1, self.word_unk
        if wid >= 0:
            lo[0, W - 1], hi[0, W - 1] = wid - 1, wid
            if not self.lexicon:
                wmask[0, self.space] = 1.0
            wmask[0, self.eos] = 1.0
        elif xi == self.space:
            zmask[0, self.space] = 1.0
            zmask[0, self.eos] = 1.0
        return lo, hi, cmask, wmask, zmask

    def _wlm_step(self, word_ids, h, nodes, xis):
        nbeam = len(word_ids)
        vecs = [self._lookahead_inputs(nodes[b], xis[b]) for b in range(nbeam)]
        stacked = [jnp.asarray(np.concatenate([v[i] for v in vecs], axis=0)) for i in range(5)]
        lo, hi, cm, wm, zm = stacked
        p = self.params
        step = self._get_step(nbeam)
        return step(jnp.asarray(np.asarray(word_ids, np.int32)), h,
                    p["emb"], p["wih"], p["whh"], p["bh"], p["who"], p["bo"],
                    lo, hi, cm, wm, zm)

    # ---------------- forward (matches reference LookAheadWordLM.forward) ----------
    def forward(self, x, state=None):
        if state is None:
            # reproduces the original quirk: var_word_unk is (re)bound to var_word_eos
            self.var_word_unk = self.var_word_eos
            h = jnp.zeros((1, self.hidden), jnp.float32)
            new_node = self.lexroot
            xi = self.space
            h, z, log_y = self._wlm_step([self.var_word_eos], h, [new_node], [xi])
            return ((h, z, new_node), log_y)

        h, z, node = state
        xi = int(x)     # host-side int (keeps the decode loop free of device->host syncs)
        if xi in self.new_word_label:
            if node is not None and node[1] >= 0:
                w = int(node[1])
            else:
                w = self.var_word_unk
            new_node = self.lexroot if xi == self.space else self.lexroot[0][xi]
            h, z, log_y = self._wlm_step([w], h, [new_node], [xi])
            return ((h, z, new_node), log_y)
        elif node is not None and xi in node[0]:
            new_node = node[0][xi]
            vecs = [jnp.asarray(v) for v in self._lookahead_inputs(new_node, xi)]
            log_y = self._look(z, *vecs)
            return ((h, z, new_node), log_y)
        elif self.open_vocab:
            log_y = jnp.zeros((1, self.subword_dict_size), jnp.float32)
            return ((h, z, None), log_y)
        else:
            log_y = jnp.full((1, self.subword_dict_size), self.logzero, jnp.float32)
            return ((h, None, None), log_y)

    def predict(self, x, state=None):
        state, y = self.forward(x, state)
        return (state, y)

    def predict_word_batch(self, word_ids, h, nodes, xis):
        """Beam-batched word-boundary step: B hypotheses advance the word LM in one fused
        kernel dispatch (who/wih/whh streamed once for the whole beam)."""
        return self._wlm_step(list(word_ids), h, list(nodes), list(xis))

    def final(self, state):
        h, z, node = state
        if node is not None and node[1] >= 0:
            w = int(node[1])
        else:
            w = self.var_word_unk
        _, z_new, _ = self._wlm_step([w], h, [self.lexroot], [self.space])
        return float(jax.nn.log_softmax(z_new, axis=-1)[0, self.word_eos])


# ----------------------------------------------------------------------------------
# pure-JAX / numpy reference (mirrors the torch cumsum formulation) for validation
# ----------------------------------------------------------------------------------
def _reference_lookahead(lm, cum, node, xi):
    succ, wid, wids = node
    S = lm.subword_dict_size
    sum_prob = float(cum[wids[1]] - cum[wids[0]]) if wids is not None else 1.0
    if sum_prob < lm.zero:
        return np.full((1, S), lm.logzero, np.float32)
    unk_prob = float(cum[lm.word_unk] - cum[lm.word_unk - 1])
    y = np.full((1, S), unk_prob * lm.oov_penalty, np.float32)
    for cid, nd in succ.items():
        y[0, cid] = float(cum[nd[2][1]] - cum[nd[2][0]]) / sum_prob
    if wid >= 0:
        wlm_prob = float(cum[wid] - cum[wid - 1]) / sum_prob
        if not lm.lexicon:
            y[0, lm.space] = wlm_prob
        y[0, lm.eos] = wlm_prob
    elif xi == lm.space:
        y[0, lm.space] = lm.zero
        y[0, lm.eos] = lm.zero
    return np.log(np.maximum(y, lm.zero))


def _reference_word_step(lm, word_id, h, node, xi):
    p = lm.params
    xemb = jnp.take(p["emb"], jnp.asarray([word_id], jnp.int32), axis=0)
    pre = (jnp.dot(xemb, p["wih"], preferred_element_type=jnp.float32)
           + jnp.dot(h.astype(jnp.bfloat16), p["whh"], preferred_element_type=jnp.float32)
           + p["bh"])
    h_new = jnp.tanh(pre)
    z = (jnp.dot(h_new.astype(jnp.bfloat16), p["who"], preferred_element_type=jnp.float32)
         + p["bo"])
    cum = np.cumsum(np.asarray(jax.nn.softmax(z, axis=-1), np.float64)[0])
    return h_new, z, _reference_lookahead(lm, cum, node, xi)


# ----------------------------------------------------------------------------------
# deterministic synthetic setup + smoke test
# ----------------------------------------------------------------------------------
def build_params(key, vocab, hidden):
    ks = jax.random.split(key, 6)
    f = lambda k, shp: 0.1 * jax.random.normal(k, shp, jnp.float32)
    return dict(
        emb=f(ks[0], (vocab, hidden)).astype(jnp.bfloat16),
        wih=f(ks[1], (hidden, hidden)).astype(jnp.bfloat16),
        whh=f(ks[2], (hidden, hidden)).astype(jnp.bfloat16),
        bh=f(ks[3], (1, hidden)),
        who=f(ks[4], (hidden, vocab)).astype(jnp.bfloat16),
        bo=f(ks[5], (1, vocab)),
    )


if __name__ == "__main__":
    HIDDEN = 64
    WORD_VOCAB = 1024   # lane-aligned word vocab

    # subword dictionary: <space>, <eos>, <unk>, characters a..h   (size 11 -> S = 12)
    letters = list("abcdefgh")
    subword_dict = {"<space>": 0, "<eos>": 1, "<unk>": 2}
    for i, c in enumerate(letters):
        subword_dict[c] = 3 + i

    # word dictionary: <eos>, <unk>, then 64 two-letter words (ids 2..65); ids 66..1023 unused
    word_dict = {"<eos>": 0, "<unk>": 1}
    wid = 2
    for c1 in letters:
        for c2 in letters:
            word_dict[c1 + c2] = wid
            wid += 1

    params = build_params(jax.random.PRNGKey(0), WORD_VOCAB, HIDDEN)
    lm = LookAheadWordLMJax(params, word_dict, subword_dict)

    # --- single-hypothesis decode (matches the reference forward semantics) ---------------
    state0, y0 = lm.predict(0, None)                        # initial state -> fused step kernel
    state1, y1 = lm.predict(subword_dict["a"], state0)      # tree descend -> look-ahead kernel
    h1, z1, _ = state1
    state2, y2 = lm.predict(lm.space, state1)               # word boundary -> fused step kernel

    for y in (y0, y1, y2):
        jax.block_until_ready(y)
        assert y.shape == (1, lm.subword_dict_size)
        assert bool(jnp.all(jnp.isfinite(y)))

    # --- numerical check against a pure-JAX / numpy port of the torch reference -----------
    rh0, rz0, ry0 = _reference_word_step(lm, lm.word_eos,
                                         jnp.zeros((1, HIDDEN), jnp.float32),
                                         lm.lexroot, lm.space)
    np.testing.assert_allclose(np.asarray(y0), ry0, atol=5e-2)

    node_a = lm.lexroot[0][subword_dict["a"]]
    cum1 = np.cumsum(np.asarray(jax.nn.softmax(z1, axis=-1), np.float64)[0])
    ry1 = _reference_lookahead(lm, cum1, node_a, subword_dict["a"])
    np.testing.assert_allclose(np.asarray(y1), ry1, atol=5e-2)

    _, _, ry2 = _reference_word_step(lm, lm.word_eos, h1, lm.lexroot, lm.space)
    np.testing.assert_allclose(np.asarray(y2), ry2, atol=5e-2)

    # --- beam-batched word-boundary step: 4 hypotheses in ONE fused kernel dispatch -------
    BEAMS = 4
    word_ids = [lm.word_eos, word_dict["aa"], word_dict["bc"], lm.word_unk]
    nodes = [lm.lexroot, lm.lexroot, node_a, lm.lexroot]
    xis = [lm.space, lm.space, subword_dict["a"], lm.space]
    h_batch = jnp.tile(h1, (BEAMS, 1))
    hb, zb, yb = lm.predict_word_batch(word_ids, h_batch, nodes, xis)
    jax.block_until_ready(yb)
    assert hb.shape == (BEAMS, lm.hidden) and zb.shape == (BEAMS, lm.word_vocab)
    assert yb.shape == (BEAMS, lm.subword_dict_size)
    assert bool(jnp.all(jnp.isfinite(yb)))
    for b in range(BEAMS):
        _, _, ryb = _reference_word_step(lm, word_ids[b], h1, nodes[b], xis[b])
        np.testing.assert_allclose(np.asarray(yb[b:b + 1]), ryb, atol=5e-2)

    print("KERNEL_OK")
</pallas_src>

<mosaic_0001>
module attributes {stable_mosaic.version = 11 : i64} {
  func.func @kernel(%arg0: i32, %arg1: memref<1x64xbf16, #tpu.memory_space<vmem>>, %arg2: memref<1x64xf32, #tpu.memory_space<vmem>>, %arg3: memref<64x64xbf16, #tpu.memory_space<vmem>>, %arg4: memref<64x64xbf16, #tpu.memory_space<vmem>>, %arg5: memref<1x64xf32, #tpu.memory_space<vmem>>, %arg6: memref<64x1024xbf16, #tpu.memory_space<vmem>>, %arg7: memref<1x1024xf32, #tpu.memory_space<vmem>>, %arg8: memref<1x128xi32, #tpu.memory_space<vmem>>, %arg9: memref<1x128xi32, #tpu.memory_space<vmem>>, %arg10: memref<1x128xf32, #tpu.memory_space<vmem>>, %arg11: memref<1x128xf32, #tpu.memory_space<vmem>>, %arg12: memref<1x128xf32, #tpu.memory_space<vmem>>, %arg13: memref<1x64xf32, #tpu.memory_space<vmem>>, %arg14: memref<1x1024xf32, #tpu.memory_space<vmem>>, %arg15: memref<1x128xf32, #tpu.memory_space<vmem>>, %arg16: memref<1x64xf32, #tpu.memory_space<vmem>>, %arg17: memref<1x128xf32, #tpu.memory_space<vmem>>, %arg18: memref<1x1xf32, #tpu.memory_space<vmem>>) attributes {dimension_semantics = [#tpu.dimension_semantics<arbitrary>], iteration_bounds = array<i64: 1>, scalar_prefetch = 0 : i64, scratch_operands = 3 : i64, tpu.core_type = #tpu.core_type<tc>, window_params = [{pipeline_mode = #tpu.pipeline_mode<synchronous>, transform_indices = @transform_0, window_bounds = array<i64: 1, 64>}, {pipeline_mode = #tpu.pipeline_mode<synchronous>, transform_indices = @transform_1, window_bounds = array<i64: 1, 64>}, {pipeline_mode = #tpu.pipeline_mode<synchronous>, transform_indices = @transform_2, window_bounds = array<i64: 64, 64>}, {pipeline_mode = #tpu.pipeline_mode<synchronous>, transform_indices = @transform_3, window_bounds = array<i64: 64, 64>}, {pipeline_mode = #tpu.pipeline_mode<synchronous>, transform_indices = @transform_4, window_bounds = array<i64: 1, 64>}, {transform_indices = @transform_5, window_bounds = array<i64: 64, 1024>}, {transform_indices = @transform_6, window_bounds = array<i64: 1, 1024>}, {pipeline_mode = #tpu.pipeline_mode<synchronous>, transform_indices = @transform_7, window_bounds = array<i64: 1, 128>}, {pipeline_mode = #tpu.pipeline_mode<synchronous>, transform_indices = @transform_8, window_bounds = array<i64: 1, 128>}, {pipeline_mode = #tpu.pipeline_mode<synchronous>, transform_indices = @transform_9, window_bounds = array<i64: 1, 128>}, {pipeline_mode = #tpu.pipeline_mode<synchronous>, transform_indices = @transform_10, window_bounds = array<i64: 1, 128>}, {pipeline_mode = #tpu.pipeline_mode<synchronous>, transform_indices = @transform_11, window_bounds = array<i64: 1, 128>}, {pipeline_mode = #tpu.pipeline_mode<synchronous>, transform_indices = @transform_12, window_bounds = array<i64: 1, 64>}, {transform_indices = @transform_13, window_bounds = array<i64: 1, 1024>}, {pipeline_mode = #tpu.pipeline_mode<synchronous>, transform_indices = @transform_14, window_bounds = array<i64: 1, 128>}]} {
    %c0_i32 = arith.constant 0 : i32
    %0 = arith.cmpi eq, %arg0, %c0_i32 : i32
    %1 = arith.extui %0 : i1 to i32
    %c0_i32_0 = arith.constant 0 : i32
    %2 = arith.cmpi ne, %1, %c0_i32_0 : i32
    scf.if %2 {
      %c0_24 = arith.constant 0 : index
      %c0_25 = arith.constant 0 : index
      %46 = vector.load %arg1[%c0_24, %c0_25] : memref<1x64xbf16, #tpu.memory_space<vmem>>, vector<1x64xbf16>
      %c0_26 = arith.constant 0 : index
      %c0_27 = arith.constant 0 : index
      %47 = vector.load %arg3[%c0_26, %c0_27] : memref<64x64xbf16, #tpu.memory_space<vmem>>, vector<64x64xbf16>
      %cst_28 = arith.constant dense<0.000000e+00> : vector<1x64xf32>
      %48 = tpu.matmul %46, %47, %cst_28 {dimension_numbers = #tpu.dot_dimension_numbers<[1], [0], [0], [1], [0, 0, 1, 1], [], []>} : vector<1x64xbf16>, vector<64x64xbf16>, vector<1x64xf32> -> vector<1x64xf32>
      %c0_29 = arith.constant 0 : index
      %c0_30 = arith.constant 0 : index
      %49 = vector.load %arg2[%c0_29, %c0_30] : memref<1x64xf32, #tpu.memory_space<vmem>>, vector<1x64xf32>
      %50 = arith.truncf %49 : vector<1x64xf32> to vector<1x64xbf16>
      %c0_31 = arith.constant 0 : index
      %c0_32 = arith.constant 0 : index
      %51 = vector.load %arg4[%c0_31, %c0_32] : memref<64x64xbf16, #tpu.memory_space<vmem>>, vector<64x64xbf16>
      %cst_33 = arith.constant dense<0.000000e+00> : vector<1x64xf32>
      %52 = tpu.matmul %50, %51, %cst_33 {dimension_numbers = #tpu.dot_dimension_numbers<[1], [0], [0], [1], [0, 0, 1, 1], [], []>} : vector<1x64xbf16>, vector<64x64xbf16>, vector<1x64xf32> -> vector<1x64xf32>
      %53 = arith.addf %48, %52 : vector<1x64xf32>
      %c0_34 = arith.constant 0 : index
      %c0_35 = arith.constant 0 : index
      %54 = vector.load %arg5[%c0_34, %c0_35] : memref<1x64xf32, #tpu.memory_space<vmem>>, vector<1x64xf32>
      %55 = arith.addf %53, %54 : vector<1x64xf32>
      %56 = math.tanh %55 : vector<1x64xf32>
      %c0_36 = arith.constant 0 : index
      %c0_37 = arith.constant 0 : index
      %57 = vector.load %arg16[%c0_36, %c0_37] : memref<1x64xf32, #tpu.memory_space<vmem>>, vector<1x64xf32>
      tpu.vector_store %arg16[%c0_36, %c0_37], %56 {strides = array<i32>} : memref<1x64xf32, #tpu.memory_space<vmem>>, vector<1x64xf32>,
      %c0_38 = arith.constant 0 : index
      %c0_39 = arith.constant 0 : index
      %58 = vector.load %arg13[%c0_38, %c0_39] : memref<1x64xf32, #tpu.memory_space<vmem>>, vector<1x64xf32>
      tpu.vector_store %arg13[%c0_38, %c0_39], %56 {strides = array<i32>} : memref<1x64xf32, #tpu.memory_space<vmem>>, vector<1x64xf32>,
      %cst_40 = arith.constant 0.000000e+00 : f32
      %59 = vector.broadcast %cst_40 : f32 to vector<1x128xf32>
      %c0_41 = arith.constant 0 : index
      %c0_42 = arith.constant 0 : index
      %60 = vector.load %arg17[%c0_41, %c0_42] : memref<1x128xf32, #tpu.memory_space<vmem>>, vector<1x128xf32>
      tpu.vector_store %arg17[%c0_41, %c0_42], %59 {strides = array<i32>} : memref<1x128xf32, #tpu.memory_space<vmem>>, vector<1x128xf32>,
      %cst_43 = arith.constant -1.000000e+30 : f32
      %61 = vector.broadcast %cst_43 : f32 to vector<1x1xf32>
      %c0_44 = arith.constant 0 : index
      %c0_45 = arith.constant 0 : index
      %62 = vector.load %arg18[%c0_44, %c0_45] : memref<1x1xf32, #tpu.memory_space<vmem>>, vector<1x1xf32>
      tpu.vector_store %arg18[%c0_44, %c0_45], %61 {strides = array<i32>} : memref<1x1xf32, #tpu.memory_space<vmem>>, vector<1x1xf32>,
    } else {
    }
    %c0 = arith.constant 0 : index
    %c0_1 = arith.constant 0 : index
    %3 = vector.load %arg16[%c0, %c0_1] : memref<1x64xf32, #tpu.memory_space<vmem>>, vector<1x64xf32>
    %4 = arith.truncf %3 : vector<1x64xf32> to vector<1x64xbf16>
    %c0_2 = arith.constant 0 : index
    %c0_3 = arith.constant 0 : index
    %5 = vector.load %arg6[%c0_2, %c0_3] : memref<64x1024xbf16, #tpu.memory_space<vmem>>, vector<64x1024xbf16>
    %cst = arith.constant dense<0.000000e+00> : vector<1x1024xf32>
    %6 = tpu.matmul %4, %5, %cst {dimension_numbers = #tpu.dot_dimension_numbers<[1], [0], [0], [1], [0, 0, 1, 1], [], []>} : vector<1x64xbf16>, vector<64x1024xbf16>, vector<1x1024xf32> -> vector<1x1024xf32>
    %c0_4 = arith.constant 0 : index
    %c0_5 = arith.constant 0 : index
    %7 = vector.load %arg7[%c0_4, %c0_5] : memref<1x1024xf32, #tpu.memory_space<vmem>>, vector<1x1024xf32>
    %8 = arith.addf %6, %7 : vector<1x1024xf32>
    %c0_6 = arith.constant 0 : index
    %c0_7 = arith.constant 0 : index
    %9 = vector.load %arg14[%c0_6, %c0_7] : memref<1x1024xf32, #tpu.memory_space<vmem>>, vector<1x1024xf32>
    tpu.vector_store %arg14[%c0_6, %c0_7], %8 {strides = array<i32>} : memref<1x1024xf32, #tpu.memory_space<vmem>>, vector<1x1024xf32>,
    %c1024_i32 = arith.constant 1024 : i32
    %10 = arith.muli %arg0, %c1024_i32 : i32
    %c0_8 = arith.constant 0 : index
    %c0_9 = arith.constant 0 : index
    %11 = vector.load %arg18[%c0_8, %c0_9] : memref<1x1xf32, #tpu.memory_space<vmem>>, vector<1x1xf32>
    %cst_10 = arith.constant dense<0xFF800000> : vector<1xf32>
    %12 = vector.multi_reduction <maximumf>, %8, %cst_10 [1] : vector<1x1024xf32> to vector<1xf32>
    %13 = vector.shape_cast %12 : vector<1xf32> to vector<1x1xf32>
    %14 = arith.maximumf %11, %13 : vector<1x1xf32>
    %15 = arith.subf %11, %14 : vector<1x1xf32>
    %16 = math.exp %15 : vector<1x1xf32>
    %17 = vector.broadcast %14 : vector<1x1xf32> to vector<1x1024xf32>
    %18 = arith.subf %8, %17 : vector<1x1024xf32>
    %19 = math.exp %18 : vector<1x1024xf32>
    %20 = arith.truncf %19 : vector<1x1024xf32> to vector<1x1024xbf16>
    %21 = tpu.iota {dimensions = array<i32: 0>} : vector<1024x128xi32>
    %c0_11 = arith.constant 0 : index
    %c0_12 = arith.constant 0 : index
    %22 = vector.load %arg8[%c0_11, %c0_12] : memref<1x128xi32, #tpu.memory_space<vmem>>, vector<1x128xi32>
    %23 = vector.broadcast %10 : i32 to vector<1x128xi32>
    %24 = arith.subi %22, %23 : vector<1x128xi32>
    %c0_13 = arith.constant 0 : index
    %c0_14 = arith.constant 0 : index
    %25 = vector.load %arg9[%c0_13, %c0_14] : memref<1x128xi32, #tpu.memory_space<vmem>>, vector<1x128xi32>
    %26 = vector.broadcast %10 : i32 to vector<1x128xi32>
    %27 = arith.subi %25, %26 : vector<1x128xi32>
    %28 = vector.broadcast %24 : vector<1x128xi32> to vector<1024x128xi32>
    %29 = arith.cmpi sgt, %21, %28 : vector<1024x128xi32>
    %30 = vector.broadcast %27 : vector<1x128xi32> to vector<1024x128xi32>
    %31 = arith.cmpi sle, %21, %30 : vector<1024x128xi32>
    %32 = arith.andi %29, %31 : vector<1024x128xi1>
    %33 = arith.extui %32 : vector<1024x128xi1> to vector<1024x128xi32>
    %34 = arith.sitofp %33 : vector<1024x128xi32> to vector<1024x128xf32>
    %35 = arith.truncf %34 : vector<1024x128xf32> to vector<1024x128xbf16>
    %cst_15 = arith.constant dense<0.000000e+00> : vector<1x128xf32>
    %36 = tpu.matmul %20, %35, %cst_15 {dimension_numbers = #tpu.dot_dimension_numbers<[1], [0], [0], [1], [0, 0, 1, 1], [], []>} : vector<1x1024xbf16>, vector<1024x128xbf16>, vector<1x128xf32> -> vector<1x128xf32>
    %c0_16 = arith.constant 0 : index
    %c0_17 = arith.constant 0 : index
    %37 = vector.load %arg17[%c0_16, %c0_17] : memref<1x128xf32, #tpu.memory_space<vmem>>, vector<1x128xf32>
    %38 = vector.broadcast %16 : vector<1x1xf32> to vector<1x128xf32>
    %39 = arith.mulf %38, %37 : vector<1x128xf32>
    %40 = arith.addf %39, %36 : vector<1x128xf32>
    %c0_18 = arith.constant 0 : index
    %c0_19 = arith.constant 0 : index
    %41 = vector.load %arg17[%c0_18, %c0_19] : memref<1x128xf32, #tpu.memory_space<vmem>>, vector<1x128xf32>
    tpu.vector_store %arg17[%c0_18, %c0_19], %40 {strides = array<i32>} : memref<1x128xf32, #tpu.memory_space<vmem>>, vector<1x128xf32>,
    %c0_20 = arith.constant 0 : index
    %c0_21 = arith.constant 0 : index
    %42 = vector.load %arg18[%c0_20, %c0_21] : memref<1x1xf32, #tpu.memory_space<vmem>>, vector<1x1xf32>
    tpu.vector_store %arg18[%c0_20, %c0_21], %14 {strides = array<i32>} : memref<1x1xf32, #tpu.memory_space<vmem>>, vector<1x1xf32>,
    %c0_i32_22 = arith.constant 0 : i32
    %43 = arith.cmpi eq, %arg0, %c0_i32_22 : i32
    %44 = arith.extui %43 : i1 to i32
    %c0_i32_23 = arith.constant 0 : i32
    %45 = arith.cmpi ne, %44, %c0_i32_23 : i32
    scf.if %45 {
      %c0_24 = arith.constant 0 : index
      %c0_25 = arith.constant 0 : index
      %46 = vector.load %arg17[%c0_24, %c0_25] : memref<1x128xf32, #tpu.memory_space<vmem>>, vector<1x128xf32>
      %47 = vector.extract_strided_slice %46 {offsets = [0, 124], sizes = [1, 1], strides = [1, 1]} : vector<1x128xf32> to vector<1x1xf32>
      %48 = vector.extract_strided_slice %46 {offsets = [0, 125], sizes = [1, 1], strides = [1, 1]} : vector<1x128xf32> to vector<1x1xf32>
      %49 = vector.extract_strided_slice %46 {offsets = [0, 126], sizes = [1, 1], strides = [1, 1]} : vector<1x128xf32> to vector<1x1xf32>
      %50 = vector.extract_strided_slice %46 {offsets = [0, 127], sizes = [1, 1], strides = [1, 1]} : vector<1x128xf32> to vector<1x1xf32>
      %cst_26 = arith.constant 1.000000e+00 : f32
      %51 = vector.broadcast %cst_26 : f32 to vector<1x1xf32>
      %52 = arith.divf %51, %47 : vector<1x1xf32>
      %53 = arith.mulf %48, %52 : vector<1x1xf32>
      %54 = arith.divf %52, %53 : vector<1x1xf32>
      %55 = arith.mulf %49, %52 : vector<1x1xf32>
      %56 = arith.mulf %50, %54 : vector<1x1xf32>
      %57 = vector.broadcast %54 : vector<1x1xf32> to vector<1x128xf32>
      %58 = arith.mulf %46, %57 : vector<1x128xf32>
      %c0_27 = arith.constant 0 : index
      %c0_28 = arith.constant 0 : index
      %59 = vector.load %arg10[%c0_27, %c0_28] : memref<1x128xf32, #tpu.memory_space<vmem>>, vector<1x128xf32>
      %cst_29 = arith.constant 5.000000e-01 : f32
      %60 = vector.broadcast %cst_29 : f32 to vector<1x128xf32>
      %61 = arith.cmpf ogt, %59, %60 : vector<1x128xf32>
      %cst_30 = arith.constant 9.99999974E-5 : f32
      %62 = vector.broadcast %cst_30 : f32 to vector<1x1xf32>
      %63 = arith.mulf %55, %62 : vector<1x1xf32>
      %64 = vector.shape_cast %63 : vector<1x1xf32> to vector<1x1xf32>
      %65 = vector.broadcast %64 : vector<1x1xf32> to vector<1x128xf32>
      %66 = arith.select %61, %58, %65 : vector<1x128xi1>, vector<1x128xf32>
      %c0_31 = arith.constant 0 : index
      %c0_32 = arith.constant 0 : index
      %67 = vector.load %arg11[%c0_31, %c0_32] : memref<1x128xf32, #tpu.memory_space<vmem>>, vector<1x128xf32>
      %cst_33 = arith.constant 5.000000e-01 : f32
      %68 = vector.broadcast %cst_33 : f32 to vector<1x128xf32>
      %69 = arith.cmpf ogt, %67, %68 : vector<1x128xf32>
      %70 = vector.shape_cast %56 : vector<1x1xf32> to vector<1x1xf32>
      %71 = vector.broadcast %70 : vector<1x1xf32> to vector<1x128xf32>
      %72 = arith.select %69, %71, %66 : vector<1x128xi1>, vector<1x128xf32>
      %c0_34 = arith.constant 0 : index
      %c0_35 = arith.constant 0 : index
      %73 = vector.load %arg12[%c0_34, %c0_35] : memref<1x128xf32, #tpu.memory_space<vmem>>, vector<1x128xf32>
      %cst_36 = arith.constant 5.000000e-01 : f32
      %74 = vector.broadcast %cst_36 : f32 to vector<1x128xf32>
      %75 = arith.cmpf ogt, %73, %74 : vector<1x128xf32>
      %cst_37 = arith.constant 1.000000e-10 : f32
      %76 = vector.broadcast %cst_37 : f32 to vector<1x128xf32>
      %77 = arith.select %75, %76, %72 : vector<1x128xi1>, vector<1x128xf32>
      %cst_38 = arith.constant 1.000000e-10 : f32
      %78 = vector.broadcast %cst_38 : f32 to vector<1x128xf32>
      %79 = arith.maximumf %77, %78 : vector<1x128xf32>
      %80 = math.log %79 : vector<1x128xf32>
      %cst_39 = arith.constant 1.000000e-10 : f32
      %81 = vector.broadcast %cst_39 : f32 to vector<1x1xf32>
      %82 = arith.cmpf olt, %53, %81 : vector<1x1xf32>
      %cst_40 = arith.constant -1.000000e+10 : f32
      %83 = vector.shape_cast %82 : vector<1x1xi1> to vector<1x1xi1>
      %84 = vector.broadcast %83 : vector<1x1xi1> to vector<1x128xi1>
      %85 = vector.broadcast %cst_40 : f32 to vector<1x128xf32>
      %86 = arith.select %84, %85, %80 : vector<1x128xi1>, vector<1x128xf32>
      %c0_41 = arith.constant 0 : index
      %c0_42 = arith.constant 0 : index
      %87 = vector.load %arg15[%c0_41, %c0_42] : memref<1x128xf32, #tpu.memory_space<vmem>>, vector<1x128xf32>
      tpu.vector_store %arg15[%c0_41, %c0_42], %86 {strides = array<i32>} : memref<1x128xf32, #tpu.memory_space<vmem>>, vector<1x128xf32>,
    } else {
    }
    return
  }
  func.func @transform_0(%arg0: i32) -> (i32, i32) {
    %c0_i32 = arith.constant 0 : i32
    %c0_i32_0 = arith.constant 0 : i32
    %c0_i32_1 = arith.constant 0 : i32
    return %c0_i32, %c0_i32_0 : i32, i32
  }
  func.func @transform_1(%arg0: i32) -> (i32, i32) {
    %c0_i32 = arith.constant 0 : i32
    %c0_i32_0 = arith.constant 0 : i32
    %c0_i32_1 = arith.constant 0 : i32
    return %c0_i32, %c0_i32_0 : i32, i32
  }
  func.func @transform_2(%arg0: i32) -> (i32, i32) {
    %c0_i32 = arith.constant 0 : i32
    %c0_i32_0 = arith.constant 0 : i32
    %c0_i32_1 = arith.constant 0 : i32
    return %c0_i32, %c0_i32_0 : i32, i32
  }
  func.func @transform_3(%arg0: i32) -> (i32, i32) {
    %c0_i32 = arith.constant 0 : i32
    %c0_i32_0 = arith.constant 0 : i32
    %c0_i32_1 = arith.constant 0 : i32
    return %c0_i32, %c0_i32_0 : i32, i32
  }
  func.func @transform_4(%arg0: i32) -> (i32, i32) {
    %c0_i32 = arith.constant 0 : i32
    %c0_i32_0 = arith.constant 0 : i32
    %c0_i32_1 = arith.constant 0 : i32
    return %c0_i32, %c0_i32_0 : i32, i32
  }
  func.func @transform_5(%arg0: i32) -> (i32, i32) {
    %c0_i32 = arith.constant 0 : i32
    %c0_i32_0 = arith.constant 0 : i32
    return %c0_i32, %arg0 : i32, i32
  }
  func.func @transform_6(%arg0: i32) -> (i32, i32) {
    %c0_i32 = arith.constant 0 : i32
    %c0_i32_0 = arith.constant 0 : i32
    return %c0_i32, %arg0 : i32, i32
  }
  func.func @transform_7(%arg0: i32) -> (i32, i32) {
    %c0_i32 = arith.constant 0 : i32
    %c0_i32_0 = arith.constant 0 : i32
    %c0_i32_1 = arith.constant 0 : i32
    return %c0_i32, %c0_i32_0 : i32, i32
  }
  func.func @transform_8(%arg0: i32) -> (i32, i32) {
    %c0_i32 = arith.constant 0 : i32
    %c0_i32_0 = arith.constant 0 : i32
    %c0_i32_1 = arith.constant 0 : i32
    return %c0_i32, %c0_i32_0 : i32, i32
  }
  func.func @transform_9(%arg0: i32) -> (i32, i32) {
    %c0_i32 = arith.constant 0 : i32
    %c0_i32_0 = arith.constant 0 : i32
    %c0_i32_1 = arith.constant 0 : i32
    return %c0_i32, %c0_i32_0 : i32, i32
  }
  func.func @transform_10(%arg0: i32) -> (i32, i32) {
    %c0_i32 = arith.constant 0 : i32
    %c0_i32_0 = arith.constant 0 : i32
    %c0_i32_1 = arith.constant 0 : i32
    return %c0_i32, %c0_i32_0 : i32, i32
  }
  func.func @transform_11(%arg0: i32) -> (i32, i32) {
    %c0_i32 = arith.constant 0 : i32
    %c0_i32_0 = arith.constant 0 : i32
    %c0_i32_1 = arith.constant 0 : i32
    return %c0_i32, %c0_i32_0 : i32, i32
  }
  func.func @transform_12(%arg0: i32) -> (i32, i32) {
    %c0_i32 = arith.constant 0 : i32
    %c0_i32_0 = arith.constant 0 : i32
    %c0_i32_1 = arith.constant 0 : i32
    return %c0_i32, %c0_i32_0 : i32, i32
  }
  func.func @transform_13(%arg0: i32) -> (i32, i32) {
    %c0_i32 = arith.constant 0 : i32
    %c0_i32_0 = arith.constant 0 : i32
    return %c0_i32, %arg0 : i32, i32
  }
  func.func @transform_14(%arg0: i32) -> (i32, i32) {
    %c0_i32 = arith.constant 0 : i32
    %c0_i32_0 = arith.constant 0 : i32
    %c0_i32_1 = arith.constant 0 : i32
    return %c0_i32, %c0_i32_0 : i32, i32
  }
}

</mosaic_0001>

<llo_original>
// kernel: step.1
$region0: #{step.1}
  #allocation0 [shape = 'u32[]', space=smem, size = 0x4, offset = 0x4, fixed_abs, tag = 'smem constant byte address 0x4 - core index']
  #allocation1 [shape = 'u32[144,128]{1,0:T(1,128)}', space=vmem, size = 0x12000, scoped, tag = 'internal scratch']
  #allocation2 [shape = 'f32[1,64]{1,0:T(1,128)}', space=vmem, size = 0x200, scoped, tag = 'scratch operand']
  #allocation3 [shape = 'f32[1,128]{1,0:T(1,128)}', space=vmem, size = 0x200, scoped, tag = 'scratch operand']
  #allocation4 [shape = 'f32[1,1]{1,0:T(1,128)}', space=vmem, size = 0x200, scoped, tag = 'scratch operand']
  %s0 = inlined_call_operand.vmem [shape: bf16[1,64], index: 0, kind: input, shape index: {}]
  %s1 = inlined_call_operand.vmem [shape: f32[1,64], index: 1, kind: input, shape index: {}]
  %s2 = inlined_call_operand.vmem [shape: bf16[64,64], index: 2, kind: input, shape index: {}]
  %s3 = inlined_call_operand.vmem [shape: bf16[64,64], index: 3, kind: input, shape index: {}]
  %s4 = inlined_call_operand.vmem [shape: f32[1,64], index: 4, kind: input, shape index: {}]
  %s5 = inlined_call_operand.hbm [shape: bf16[64,1024], index: 5, kind: input, shape index: {}]
  %s6 = inlined_call_operand.vmem [shape: f32[1,1024], index: 6, kind: input, shape index: {}]
  %s7 = inlined_call_operand.vmem [shape: s32[1,128], index: 7, kind: input, shape index: {}]
  %s8 = inlined_call_operand.vmem [shape: s32[1,128], index: 8, kind: input, shape index: {}]
  %s9 = inlined_call_operand.vmem [shape: f32[1,128], index: 9, kind: input, shape index: {}]
  %s10 = inlined_call_operand.vmem [shape: f32[1,128], index: 10, kind: input, shape index: {}]
  %s11 = inlined_call_operand.vmem [shape: f32[1,128], index: 11, kind: input, shape index: {}]
  %s12 = inlined_call_operand.hbm [shape: f32[1,64], index: 12, kind: output, shape index: {0}]
  %s13 = inlined_call_operand.hbm [shape: f32[1,1024], index: 13, kind: output, shape index: {1}]
  %s14 = inlined_call_operand.hbm [shape: f32[1,128], index: 14, kind: output, shape index: {2}]
  %15 = xla_tuple %s12, %s13, %s14
  %s16 = sld [smem:[#allocation0]]
  $region86: #{step.1} parent=0
    _
  %s18 = ssub.s32 1, %s16
  %s19 = scalar_select 0, %s18, %s16
  $region1: #{step.1} parent=0
    #allocation5 [shape = 'u8[131072]{0}', space=vmem, size = 0x20000, scoped, tag = 'input window, operand 5, single buffered']
    #allocation6 [shape = 's32[1]{0}', space=sflag, size = 0x4, scoped, tag = 'scoped memory for step.1']
    #allocation7 [shape = 's32[1]{0}', space=sflag, size = 0x4, scoped, tag = 'scoped memory for step.1']
    #allocation8 [shape = 'u8[512]{0}', space=vmem, size = 0x400, scoped, tag = 'output window, operand 0, single buffered']
    #allocation9 [shape = 'u8[4096]{0}', space=vmem, size = 0x1000, scoped, tag = 'output window, operand 1, single buffered']
    #allocation10 [shape = 's32[1]{0}', space=sflag, size = 0x4, scoped, tag = 'scoped memory for step.1']
    #allocation11 [shape = 'u8[512]{0}', space=vmem, size = 0x400, scoped, tag = 'output window, operand 2, single buffered']
    %20 = vsyncpa [#allocation6], 0
    %21 = vsyncpa [#allocation7], 0
    %22 = vsyncpa [#allocation10], 0
    // Predicated region
    $region2: #{step.1} parent=1 // pred_check
      _
    $region3: #{step.1} parent=1 // pred_check_branch
      %24 = sbr.rel (0) target = $region5
    $region4: #{step.1} parent=1 // pred_region
      _
    $region5: #{step.1} parent=1 // pred_fallthru
      _
    // Predicated region
    $region6: #{step.1} parent=1 // pred_check
      _
    $region7: #{step.1} parent=1 // pred_check_branch
      %26 = sbr.rel (0) target = $region9
    $region8: #{step.1} parent=1 // pred_region
      _
    $region9: #{step.1} parent=1 // pred_fallthru
      _
    // Predicated region
    $region10: #{step.1} parent=1 // pred_check
      _
    $region11: #{step.1} parent=1 // pred_check_branch
      %28 = sbr.rel (0) target = $region13
    $region12: #{step.1} parent=1 // pred_region
      _
    $region13: #{step.1} parent=1 // pred_fallthru
      _
    // Predicated region
    $region14: #{step.1} parent=1 // pred_check
      _
    $region15: #{step.1} parent=1 // pred_check_branch
      %30 = sbr.rel (0) target = $region17
    $region16: #{step.1} parent=1 // pred_region
      _
    $region17: #{step.1} parent=1 // pred_fallthru
      _
    // Predicated region
    $region18: #{step.1} parent=1 // pred_check
      _
    $region19: #{step.1} parent=1 // pred_check_branch
      %32 = sbr.rel (0) target = $region21
    $region20: #{step.1} parent=1 // pred_region
      _
    $region21: #{step.1} parent=1 // pred_fallthru
      _
    // Predicated region
    $region22: #{step.1} parent=1 // pred_check
      _
    $region23: #{step.1} parent=1 // pred_check_branch
      %34 = sbr.rel (0) target = $region25
    $region24: #{step.1} parent=1 // pred_region
      %s36 = ssub.s32 4096, 4096
      %37 = vsyncadd [#allocation6], %s36
      %s38 = sshll.u32 [#allocation5], 4
      %s39 = int_to_ptr.vmem [resolvable:$true] %s38
      %44 = dma.hbm_to_vmem [thread:$0]  %s5, 4096, %s39, [#allocation6], 512, 512, 32
    $region25: #{step.1} parent=1 // pred_fallthru
      _
    // Predicated region
    $region26: #{step.1} parent=1 // pred_check
      _
    $region27: #{step.1} parent=1 // pred_check_branch
      %46 = sbr.rel (0) target = $region29
    $region28: #{step.1} parent=1 // pred_region
      _
    $region29: #{step.1} parent=1 // pred_fallthru
      _
    // Predicated region
    $region30: #{step.1} parent=1 // pred_check
      _
    $region31: #{step.1} parent=1 // pred_check_branch
      %48 = sbr.rel (0) target = $region33
    $region32: #{step.1} parent=1 // pred_region
      _
    $region33: #{step.1} parent=1 // pred_fallthru
      _
    // Predicated region
    $region34: #{step.1} parent=1 // pred_check
      _
    $region35: #{step.1} parent=1 // pred_check_branch
      %50 = sbr.rel (0) target = $region37
    $region36: #{step.1} parent=1 // pred_region
      _
    $region37: #{step.1} parent=1 // pred_fallthru
      _
    // Predicated region
    $region38: #{step.1} parent=1 // pred_check
      _
    $region39: #{step.1} parent=1 // pred_check_branch
      %52 = sbr.rel (0) target = $region41
    $region40: #{step.1} parent=1 // pred_region
      _
    $region41: #{step.1} parent=1 // pred_fallthru
      _
    // Predicated region
    $region42: #{step.1} parent=1 // pred_check
      _
    $region43: #{step.1} parent=1 // pred_check_branch
      %54 = sbr.rel (0) target = $region45
    $region44: #{step.1} parent=1 // pred_region
      _
    $region45: #{step.1} parent=1 // pred_fallthru
      _
    // Predicated region
    $region46: #{step.1} parent=1 // pred_check
      _
    $region47: #{step.1} parent=1 // pred_check_branch
      %56 = sbr.rel (0) target = $region49
    $region48: #{step.1} parent=1 // pred_region
      _
    $region49: #{step.1} parent=1 // pred_fallthru
      _
    // Predicated region
    $region50: #{step.1} parent=1 // pred_check
      _
    $region51: #{step.1} parent=1 // pred_check_branch
      %58 = sbr.rel (0) target = $region53
    $region52: #{step.1} parent=1 // pred_region
      %59 = dma.done [#allocation6], 4096
    $region53: #{step.1} parent=1 // pred_fallthru
      _
    %p61 = scmp.eq.s32.totalorder 0, 0
    // Predicated region
    $region54: #{step.1} parent=1 // pred_check
      %p62 = pneg %p61
    $region55: #{step.1} parent=1 // pred_check_branch
      %64 = sbr.rel (%p62) target = $region57
    $region56: #{step.1} parent=1 // pred_region
      %v65 = vld [vmem:[%s0] sm:$0x1]
      %v66 = vld [vmem:[%s2] sm:$0xf]
      %v67 = vld [vmem:[%s2 + $0x4] sm:$0xf]
      %v68 = vld [vmem:[%s2 + $0x8] sm:$0xf]
      %v69 = vld [vmem:[%s2 + $0xc] sm:$0xf]
      %v70 = vld [vmem:[%s2 + $0x10] sm:$0xf]
      %v71 = vld [vmem:[%s2 + $0x14] sm:$0xf]
      %v72 = vld [vmem:[%s2 + $0x18] sm:$0xf]
      %v73 = vld [vmem:[%s2 + $0x1c] sm:$0xf]
      %v74 = vld [vmem:[%s1] sm:$0x1]
      %v75 = vpack.c.bf16 %v74, %v74
      %v76 = vld [vmem:[%s3] sm:$0xf]
      %v77 = vld [vmem:[%s3 + $0x4] sm:$0xf]
      %v78 = vld [vmem:[%s3 + $0x8] sm:$0xf]
      %v79 = vld [vmem:[%s3 + $0xc] sm:$0xf]
      %v80 = vld [vmem:[%s3 + $0x10] sm:$0xf]
      %v81 = vld [vmem:[%s3 + $0x14] sm:$0xf]
      %v82 = vld [vmem:[%s3 + $0x18] sm:$0xf]
      %v83 = vld [vmem:[%s3 + $0x1c] sm:$0xf]
      %v92 = vunpack.c.l.b16 %v76
      %v93 = vunpack.c.l.b16 %v77
      %v94 = vunpack.c.l.b16 %v78
      %v95 = vunpack.c.l.b16 %v79
      %v96 = vunpack.c.l.b16 %v80
      %v97 = vunpack.c.l.b16 %v81
      %v98 = vunpack.c.l.b16 %v82
      %v99 = vunpack.c.l.b16 %v83
      %v100 = vpack.c.b16 %v93, %v92
      %v101 = vpack.c.b16 %v95, %v94
      %v102 = vpack.c.b16 %v97, %v96
      %v103 = vpack.c.b16 %v99, %v98
      %vm108 = vcmask 523264
      %v110 = vsel %vm108, %v75, 0
      %112 = vmatprep.subr.bf16.mxu0 0
      %113 = vmatpush1.bf16.msra.mxu0 0
      %114 = vmatprep.subr.bf16.mxu0 0
      %115 = vmatpush1.bf16.msra.mxu0 0
      %116 = vmatprep.subr.bf16.mxu0 0
      %117 = vmatpush1.bf16.msra.mxu0 0
      %118 = vmatprep.subr.bf16.mxu0 0
      %119 = vmatpush1.bf16.msra.mxu0 0
      %120 = vmatprep.subr.bf16.mxu0 0
      %121 = vmatpush1.bf16.msra.mxu0 %v103
      %122 = vmatprep.subr.bf16.mxu0 0
      %123 = vmatpush1.bf16.msra.mxu0 %v102
      %124 = vmatprep.subr.bf16.mxu0 0
      %125 = vmatpush1.bf16.msra.mxu0 %v101
      %126 = vmatprep.subr.bf16.mxu0 0
      %127 = vmatpush1.bf16.msra.mxu0 %v100
      %128 = vmatprep.subr.bf16.mxu0 0
      %129 = vmatpush2.bf16.msra.mxu0 0
      %130 = vmatprep.subr.bf16.mxu0 0
      %131 = vmatpush2.bf16.msra.mxu0 0
      %132 = vmatprep.subr.bf16.mxu0 0
      %133 = vmatpush2.bf16.msra.mxu0 0
      %134 = vmatprep.subr.bf16.mxu0 0
      %135 = vmatpush2.bf16.msra.mxu0 0
      %136 = vmatprep.subr.bf16.mxu0 0
      %137 = vmatpush2.bf16.msra.mxu0 0
      %138 = vmatprep.subr.bf16.mxu0 0
      %139 = vmatpush2.bf16.msra.mxu0 0
      %140 = vmatprep.subr.bf16.mxu0 0
      %141 = vmatpush2.bf16.msra.mxu0 0
      %142 = vmatprep.subr.bf16.mxu0 0
      %143 = vmatpush2.bf16.msra.mxu0 0
      %144 = vmatprep.mubr.bf16.mxu0 0
      %145 = vmatmul.mubr.bf16.gmra.mxu0 %v110
      %v146 = vpop.f32.mrf.mxu0
      %v147 = vadd.f32 0.0, %v146
      %v148 = vpop.f32.mrf.mxu0
      %v149 = vpop.f32.mrf.mxu0
      %v150 = vpop.f32.mrf.mxu0
      %151 = vdwg.mxu0
      %v160 = vunpack.c.l.b16 %v66
      %v161 = vunpack.c.l.b16 %v67
      %v162 = vunpack.c.l.b16 %v68
      %v163 = vunpack.c.l.b16 %v69
      %v164 = vunpack.c.l.b16 %v70
      %v165 = vunpack.c.l.b16 %v71
      %v166 = vunpack.c.l.b16 %v72
      %v167 = vunpack.c.l.b16 %v73
      %v168 = vpack.c.b16 %v161, %v160
      %v169 = vpack.c.b16 %v163, %v162
      %v170 = vpack.c.b16 %v165, %v164
      %v171 = vpack.c.b16 %v167, %v166
      %v177 = vsel %vm108, %v65, 0
      %179 = vmatprep.subr.bf16.mxu0 0
      %180 = vmatpush1.bf16.msra.mxu0 0
      %181 = vmatprep.subr.bf16.mxu0 0
      %182 = vmatpush1.bf16.msra.mxu0 0
      %183 = vmatprep.subr.bf16.mxu0 0
      %184 = vmatpush1.bf16.msra.mxu0 0
      %185 = vmatprep.subr.bf16.mxu0 0
      %186 = vmatpush1.bf16.msra.mxu0 0
      %187 = vmatprep.subr.bf16.mxu0 0
      %188 = vmatpush1.bf16.msra.mxu0 %v171
      %189 = vmatprep.subr.bf16.mxu0 0
      %190 = vmatpush1.bf16.msra.mxu0 %v170
      %191 = vmatprep.subr.bf16.mxu0 0
      %192 = vmatpush1.bf16.msra.mxu0 %v169
      %193 = vmatprep.subr.bf16.mxu0 0
      %194 = vmatpush1.bf16.msra.mxu0 %v168
      %195 = vmatprep.subr.bf16.mxu0 0
      %196 = vmatpush2.bf16.msra.mxu0 0
      %197 = vmatprep.subr.bf16.mxu0 0
      %198 = vmatpush2.bf16.msra.mxu0 0
      %199 = vmatprep.subr.bf16.mxu0 0
      %200 = vmatpush2.bf16.msra.mxu0 0
      %201 = vmatprep.subr.bf16.mxu0 0
      %202 = vmatpush2.bf16.msra.mxu0 0
      %203 = vmatprep.subr.bf16.mxu0 0
      %204 = vmatpush2.bf16.msra.mxu0 0
      %205 = vmatprep.subr.bf16.mxu0 0
      %206 = vmatpush2.bf16.msra.mxu0 0
      %207 = vmatprep.subr.bf16.mxu0 0
      %208 = vmatpush2.bf16.msra.mxu0 0
      %209 = vmatprep.subr.bf16.mxu0 0
      %210 = vmatpush2.bf16.msra.mxu0 0
      %211 = vmatprep.mubr.bf16.mxu0 0
      %212 = vmatmul.mubr.bf16.gmra.mxu0 %v177
      %v213 = vpop.f32.mrf.mxu0
      %v214 = vadd.f32 %v147, %v213
      %v215 = vpop.f32.mrf.mxu0
      %v216 = vpop.f32.mrf.mxu0
      %v217 = vpop.f32.mrf.mxu0
      %218 = vdwg.mxu0
      %v219 = vld [vmem:[%s4] sm:$0x1]
      %v220 = vadd.f32 %v214, %v219
      %v221 = vtanh.pop %v220
      %vm222 = vcmask 516096
      %223 = vst.msk [vmem:[#allocation2] sm:$0x1] %vm222, %v221
      %224 = vst.msk [vmem:[#allocation8] sm:$0x1] %vm222, %v221
      %225 = vst [vmem:[#allocation3] sm:$0x1] 0.0
      %vm226 = vcmask 0
      %227 = vst.msk [vmem:[#allocation4] sm:$0x1] %vm226, -1e+30
    $region57: #{step.1} parent=1 // pred_fallthru
      _
    %v228 = vld [vmem:[#allocation2] sm:$0x1]
    %v229 = vpack.c.bf16 %v228, %v228
    %v230 = vld [vmem:[#allocation5] sm:$0xff]
    %v231 = vld [vmem:[#allocation5 + $0x8] sm:$0xff]
    %v232 = vld [vmem:[#allocation5 + $0x10] sm:$0xff]
    %v233 = vld [vmem:[#allocation5 + $0x18] sm:$0xff]
    %v234 = vld [vmem:[#allocation5 + $0x20] sm:$0xff]
    %v235 = vld [vmem:[#allocation5 + $0x28] sm:$0xff]
    %v236 = vld [vmem:[#allocation5 + $0x30] sm:$0xff]
    %v237 = vld [vmem:[#allocation5 + $0x38] sm:$0xff]
    %v238 = vld [vmem:[#allocation5 + $0x40] sm:$0xff]
    %v239 = vld [vmem:[#allocation5 + $0x48] sm:$0xff]
    %v240 = vld [vmem:[#allocation5 + $0x50] sm:$0xff]
    %v241 = vld [vmem:[#allocation5 + $0x58] sm:$0xff]
    %v242 = vld [vmem:[#allocation5 + $0x60] sm:$0xff]
    %v243 = vld [vmem:[#allocation5 + $0x68] sm:$0xff]
    %v244 = vld [vmem:[#allocation5 + $0x70] sm:$0xff]
    %v245 = vld [vmem:[#allocation5 + $0x78] sm:$0xff]
    %v246 = vld [vmem:[#allocation5 + $0x80] sm:$0xff]
    %v247 = vld [vmem:[#allocation5 + $0x88] sm:$0xff]
    %v248 = vld [vmem:[#allocation5 + $0x90] sm:$0xff]
    %v249 = vld [vmem:[#allocation5 + $0x98] sm:$0xff]
    %v250 = vld [vmem:[#allocation5 + $0xa0] sm:$0xff]
    %v251 = vld [vmem:[#allocation5 + $0xa8] sm:$0xff]
    %v252 = vld [vmem:[#allocation5 + $0xb0] sm:$0xff]
    %v253 = vld [vmem:[#allocation5 + $0xb8] sm:$0xff]
    %v254 = vld [vmem:[#allocation5 + $0xc0] sm:$0xff]
    %v255 = vld [vmem:[#allocation5 + $0xc8] sm:$0xff]
    %v256 = vld [vmem:[#allocation5 + $0xd0] sm:$0xff]
    %v257 = vld [vmem:[#allocation5 + $0xd8] sm:$0xff]
    %v258 = vld [vmem:[#allocation5 + $0xe0] sm:$0xff]
    %v259 = vld [vmem:[#allocation5 + $0xe8] sm:$0xff]
    %v260 = vld [vmem:[#allocation5 + $0xf0] sm:$0xff]
    %v261 = vld [vmem:[#allocation5 + $0xf8] sm:$0xff]
    %v262 = vld [vmem:[%s6] sm:$0xff]
    %v295 = vunpack.c.l.b16 %v230
    %v296 = vunpack.c.h.b16 %v230
    %v297 = vunpack.c.l.b16 %v231
    %v298 = vunpack.c.h.b16 %v231
    %v299 = vunpack.c.l.b16 %v232
    %v300 = vunpack.c.h.b16 %v232
    %v301 = vunpack.c.l.b16 %v233
    %v302 = vunpack.c.h.b16 %v233
    %v303 = vunpack.c.l.b16 %v234
    %v304 = vunpack.c.h.b16 %v234
    %v305 = vunpack.c.l.b16 %v235
    %v306 = vunpack.c.h.b16 %v235
    %v307 = vunpack.c.l.b16 %v236
    %v308 = vunpack.c.h.b16 %v236
    %v309 = vunpack.c.l.b16 %v237
    %v310 = vunpack.c.h.b16 %v237
    %v311 = vunpack.c.l.b16 %v238
    %v312 = vunpack.c.h.b16 %v238
    %v313 = vunpack.c.l.b16 %v239
    %v314 = vunpack.c.h.b16 %v239
    %v315 = vunpack.c.l.b16 %v240
    %v316 = vunpack.c.h.b16 %v240
    %v317 = vunpack.c.l.b16 %v241
    %v318 = vunpack.c.h.b16 %v241
    %v319 = vunpack.c.l.b16 %v242
    %v320 = vunpack.c.h.b16 %v242
    %v321 = vunpack.c.l.b16 %v243
    %v322 = vunpack.c.h.b16 %v243
    %v323 = vunpack.c.l.b16 %v244
    %v324 = vunpack.c.h.b16 %v244
    %v325 = vunpack.c.l.b16 %v245
    %v326 = vunpack.c.h.b16 %v245
    %v327 = vunpack.c.l.b16 %v246
    %v328 = vunpack.c.h.b16 %v246
    %v329 = vunpack.c.l.b16 %v247
    %v330 = vunpack.c.h.b16 %v247
    %v331 = vunpack.c.l.b16 %v248
    %v332 = vunpack.c.h.b16 %v248
    %v333 = vunpack.c.l.b16 %v249
    %v334 = vunpack.c.h.b16 %v249
    %v335 = vunpack.c.l.b16 %v250
    %v336 = vunpack.c.h.b16 %v250
    %v337 = vunpack.c.l.b16 %v251
    %v338 = vunpack.c.h.b16 %v251
    %v339 = vunpack.c.l.b16 %v252
    %v340 = vunpack.c.h.b16 %v252
    %v341 = vunpack.c.l.b16 %v253
    %v342 = vunpack.c.h.b16 %v253
    %v343 = vunpack.c.l.b16 %v254
    %v344 = vunpack.c.h.b16 %v254
    %v345 = vunpack.c.l.b16 %v255
    %v346 = vunpack.c.h.b16 %v255
    %v347 = vunpack.c.l.b16 %v256
    %v348 = vunpack.c.h.b16 %v256
    %v349 = vunpack.c.l.b16 %v257
    %v350 = vunpack.c.h.b16 %v257
    %v351 = vunpack.c.l.b16 %v258
    %v352 = vunpack.c.h.b16 %v258
    %v353 = vunpack.c.l.b16 %v259
    %v354 = vunpack.c.h.b16 %v259
    %v355 = vunpack.c.l.b16 %v260
    %v356 = vunpack.c.h.b16 %v260
    %v357 = vunpack.c.l.b16 %v261
    %v358 = vunpack.c.h.b16 %v261
    %v359 = vpack.c.b16 %v303, %v295
    %v360 = vpack.c.b16 %v304, %v296
    %v361 = vpack.c.b16 %v305, %v297
    %v362 = vpack.c.b16 %v306, %v298
    %v363 = vpack.c.b16 %v307, %v299
    %v364 = vpack.c.b16 %v308, %v300
    %v365 = vpack.c.b16 %v309, %v301
    %v366 = vpack.c.b16 %v310, %v302
    %v367 = vpack.c.b16 %v319, %v311
    %v368 = vpack.c.b16 %v320, %v312
    %v369 = vpack.c.b16 %v321, %v313
    %v370 = vpack.c.b16 %v322, %v314
    %v371 = vpack.c.b16 %v323, %v315
    %v372 = vpack.c.b16 %v324, %v316
    %v373 = vpack.c.b16 %v325, %v317
    %v374 = vpack.c.b16 %v326, %v318
    %v375 = vpack.c.b16 %v335, %v327
    %v376 = vpack.c.b16 %v336, %v328
    %v377 = vpack.c.b16 %v337, %v329
    %v378 = vpack.c.b16 %v338, %v330
    %v379 = vpack.c.b16 %v339, %v331
    %v380 = vpack.c.b16 %v340, %v332
    %v381 = vpack.c.b16 %v341, %v333
    %v382 = vpack.c.b16 %v342, %v334
    %v383 = vpack.c.b16 %v351, %v343
    %v384 = vpack.c.b16 %v352, %v344
    %v385 = vpack.c.b16 %v353, %v345
    %v386 = vpack.c.b16 %v354, %v346
    %v387 = vpack.c.b16 %v355, %v347
    %v388 = vpack.c.b16 %v356, %v348
    %v389 = vpack.c.b16 %v357, %v349
    %v390 = vpack.c.b16 %v358, %v350
    %v424 = vlaneseq
    %v425 = vshrl.u32 %v424, 7
    %v426 = vsub.s32 0, %v425
    %v427 = vrot.slane %v262, %v426
    %v428 = vlaneseq
    %v429 = vshrl.u32 %v428, 7
    %v430 = vsub.s32 1, %v429
    %v431 = vrot.slane %v262, %v430
    %v432 = vlaneseq
    %v433 = vshrl.u32 %v432, 7
    %v434 = vsub.s32 2, %v433
    %v435 = vrot.slane %v262, %v434
    %v436 = vlaneseq
    %v437 = vshrl.u32 %v436, 7
    %v438 = vsub.s32 3, %v437
    %v439 = vrot.slane %v262, %v438
    %v440 = vlaneseq
    %v441 = vshrl.u32 %v440, 7
    %v442 = vsub.s32 4, %v441
    %v443 = vrot.slane %v262, %v442
    %v444 = vlaneseq
    %v445 = vshrl.u32 %v444, 7
    %v446 = vsub.s32 5, %v445
    %v447 = vrot.slane %v262, %v446
    %v448 = vlaneseq
    %v449 = vshrl.u32 %v448, 7
    %v450 = vsub.s32 6, %v449
    %v451 = vrot.slane %v262, %v450
    %v452 = vlaneseq
    %v453 = vshrl.u32 %v452, 7
    %v454 = vsub.s32 7, %v453
    %v455 = vrot.slane %v262, %v454
    %vm464 = vcmask 523264
    %v466 = vsel %vm464, %v229, 0
    %468 = vmatprep.subr.bf16.mxu0 0
    %469 = vmatpush1.bf16.msra.mxu0 0
    %470 = vmatprep.subr.bf16.mxu0 0
    %471 = vmatpush1.bf16.msra.mxu0 0
    %472 = vmatprep.subr.bf16.mxu0 0
    %473 = vmatpush1.bf16.msra.mxu0 0
    %474 = vmatprep.subr.bf16.mxu0 0
    %475 = vmatpush1.bf16.msra.mxu0 0
    %476 = vmatprep.subr.bf16.mxu0 %v384
    %477 = vmatpush1.bf16.msra.mxu0 %v383
    %478 = vmatprep.subr.bf16.mxu0 %v376
    %479 = vmatpush1.bf16.msra.mxu0 %v375
    %480 = vmatprep.subr.bf16.mxu0 %v368
    %481 = vmatpush1.bf16.msra.mxu0 %v367
    %482 = vmatprep.subr.bf16.mxu0 %v360
    %483 = vmatpush1.bf16.msra.mxu0 %v359
    %484 = vmatprep.subr.bf16.mxu0 0
    %485 = vmatpush2.bf16.msra.mxu0 0
    %486 = vmatprep.subr.bf16.mxu0 0
    %487 = vmatpush2.bf16.msra.mxu0 0
    %488 = vmatprep.subr.bf16.mxu0 0
    %489 = vmatpush2.bf16.msra.mxu0 0
    %490 = vmatprep.subr.bf16.mxu0 0
    %491 = vmatpush2.bf16.msra.mxu0 0
    %492 = vmatprep.subr.bf16.mxu0 0
    %493 = vmatpush2.bf16.msra.mxu0 0
    %494 = vmatprep.subr.bf16.mxu0 0
    %495 = vmatpush2.bf16.msra.mxu0 0
    %496 = vmatprep.subr.bf16.mxu0 0
    %497 = vmatpush2.bf16.msra.mxu0 0
    %498 = vmatprep.subr.bf16.mxu0 0
    %499 = vmatpush2.bf16.msra.mxu0 0
    %500 = vmatprep.mubr.bf16.mxu0 0
    %501 = vmatmul.mubr.bf16.gmra.mxu0 %v466
    %v502 = vpop.f32.mrf.mxu0
    %v503 = vadd.f32 %v427, %v502
    %v504 = vpop.f32.mrf.mxu0
    %v505 = vadd.f32 %v431, %v504
    %v506 = vpop.f32.mrf.mxu0
    %v507 = vpop.f32.mrf.mxu0
    %508 = vdwg.mxu0
    %509 = vmatprep.subr.bf16.mxu0 0
    %510 = vmatpush1.bf16.msra.mxu0 0
    %511 = vmatprep.subr.bf16.mxu0 0
    %512 = vmatpush1.bf16.msra.mxu0 0
    %513 = vmatprep.subr.bf16.mxu0 0
    %514 = vmatpush1.bf16.msra.mxu0 0
    %515 = vmatprep.subr.bf16.mxu0 0
    %516 = vmatpush1.bf16.msra.mxu0 0
    %517 = vmatprep.subr.bf16.mxu0 %v386
    %518 = vmatpush1.bf16.msra.mxu0 %v385
    %519 = vmatprep.subr.bf16.mxu0 %v378
    %520 = vmatpush1.bf16.msra.mxu0 %v377
    %521 = vmatprep.subr.bf16.mxu0 %v370
    %522 = vmatpush1.bf16.msra.mxu0 %v369
    %523 = vmatprep.subr.bf16.mxu0 %v362
    %524 = vmatpush1.bf16.msra.mxu0 %v361
    %525 = vmatprep.subr.bf16.mxu0 0
    %526 = vmatpush2.bf16.msra.mxu0 0
    %527 = vmatprep.subr.bf16.mxu0 0
    %528 = vmatpush2.bf16.msra.mxu0 0
    %529 = vmatprep.subr.bf16.mxu0 0
    %530 = vmatpush2.bf16.msra.mxu0 0
    %531 = vmatprep.subr.bf16.mxu0 0
    %532 = vmatpush2.bf16.msra.mxu0 0
    %533 = vmatprep.subr.bf16.mxu0 0
    %534 = vmatpush2.bf16.msra.mxu0 0
    %535 = vmatprep.subr.bf16.mxu0 0
    %536 = vmatpush2.bf16.msra.mxu0 0
    %537 = vmatprep.subr.bf16.mxu0 0
    %538 = vmatpush2.bf16.msra.mxu0 0
    %539 = vmatprep.subr.bf16.mxu0 0
    %540 = vmatpush2.bf16.msra.mxu0 0
    %541 = vmatprep.mubr.bf16.mxu0 0
    %542 = vmatmul.mubr.bf16.gmra.mxu0 %v466
    %v543 = vpop.f32.mrf.mxu0
    %v544 = vadd.f32 %v435, %v543
    %v545 = vpop.f32.mrf.mxu0
    %v546 = vadd.f32 %v439, %v545
    %v547 = vpop.f32.mrf.mxu0
    %v548 = vpop.f32.mrf.mxu0
    %549 = vdwg.mxu0
    %550 = vmatprep.subr.bf16.mxu0 0
    %551 = vmatpush1.bf16.msra.mxu0 0
    %552 = vmatprep.subr.bf16.mxu0 0
    %553 = vmatpush1.bf16.msra.mxu0 0
    %554 = vmatprep.subr.bf16.mxu0 0
    %555 = vmatpush1.bf16.msra.mxu0 0
    %556 = vmatprep.subr.bf16.mxu0 0
    %557 = vmatpush1.bf16.msra.mxu0 0
    %558 = vmatprep.subr.bf16.mxu0 %v388
    %559 = vmatpush1.bf16.msra.mxu0 %v387
    %560 = vmatprep.subr.bf16.mxu0 %v380
    %561 = vmatpush1.bf16.msra.mxu0 %v379
    %562 = vmatprep.subr.bf16.mxu0 %v372
    %563 = vmatpush1.bf16.msra.mxu0 %v371
    %564 = vmatprep.subr.bf16.mxu0 %v364
    %565 = vmatpush1.bf16.msra.mxu0 %v363
    %566 = vmatprep.subr.bf16.mxu0 0
    %567 = vmatpush2.bf16.msra.mxu0 0
    %568 = vmatprep.subr.bf16.mxu0 0
    %569 = vmatpush2.bf16.msra.mxu0 0
    %570 = vmatprep.subr.bf16.mxu0 0
    %571 = vmatpush2.bf16.msra.mxu0 0
    %572 = vmatprep.subr.bf16.mxu0 0
    %573 = vmatpush2.bf16.msra.mxu0 0
    %574 = vmatprep.subr.bf16.mxu0 0
    %575 = vmatpush2.bf16.msra.mxu0 0
    %576 = vmatprep.subr.bf16.mxu0 0
    %577 = vmatpush2.bf16.msra.mxu0 0
    %578 = vmatprep.subr.bf16.mxu0 0
    %579 = vmatpush2.bf16.msra.mxu0 0
    %580 = vmatprep.subr.bf16.mxu0 0
    %581 = vmatpush2.bf16.msra.mxu0 0
    %582 = vmatprep.mubr.bf16.mxu0 0
    %583 = vmatmul.mubr.bf16.gmra.mxu0 %v466
    %v584 = vpop.f32.mrf.mxu0
    %v585 = vadd.f32 %v443, %v584
    %v586 = vpop.f32.mrf.mxu0
    %v587 = vadd.f32 %v447, %v586
    %v588 = vpop.f32.mrf.mxu0
    %v589 = vpop.f32.mrf.mxu0
    %590 = vdwg.mxu0
    %591 = vmatprep.subr.bf16.mxu0 0
    %592 = vmatpush1.bf16.msra.mxu0 0
    %593 = vmatprep.subr.bf16.mxu0 0
    %594 = vmatpush1.bf16.msra.mxu0 0
    %595 = vmatprep.subr.bf16.mxu0 0
    %596 = vmatpush1.bf16.msra.mxu0 0
    %597 = vmatprep.subr.bf16.mxu0 0
    %598 = vmatpush1.bf16.msra.mxu0 0
    %599 = vmatprep.subr.bf16.mxu0 %v390
    %600 = vmatpush1.bf16.msra.mxu0 %v389
    %601 = vmatprep.subr.bf16.mxu0 %v382
    %602 = vmatpush1.bf16.msra.mxu0 %v381
    %603 = vmatprep.subr.bf16.mxu0 %v374
    %604 = vmatpush1.bf16.msra.mxu0 %v373
    %605 = vmatprep.subr.bf16.mxu0 %v366
    %606 = vmatpush1.bf16.msra.mxu0 %v365
    %607 = vmatprep.subr.bf16.mxu0 0
    %608 = vmatpush2.bf16.msra.mxu0 0
    %609 = vmatprep.subr.bf16.mxu0 0
    %610 = vmatpush2.bf16.msra.mxu0 0
    %611 = vmatprep.subr.bf16.mxu0 0
    %612 = vmatpush2.bf16.msra.mxu0 0
    %613 = vmatprep.subr.bf16.mxu0 0
    %614 = vmatpush2.bf16.msra.mxu0 0
    %615 = vmatprep.subr.bf16.mxu0 0
    %616 = vmatpush2.bf16.msra.mxu0 0
    %617 = vmatprep.subr.bf16.mxu0 0
    %618 = vmatpush2.bf16.msra.mxu0 0
    %619 = vmatprep.subr.bf16.mxu0 0
    %620 = vmatpush2.bf16.msra.mxu0 0
    %621 = vmatprep.subr.bf16.mxu0 0
    %622 = vmatpush2.bf16.msra.mxu0 0
    %623 = vmatprep.mubr.bf16.mxu0 0
    %624 = vmatmul.mubr.bf16.gmra.mxu0 %v466
    %v625 = vpop.f32.mrf.mxu0
    %v626 = vadd.f32 %v451, %v625
    %v627 = vpop.f32.mrf.mxu0
    %v628 = vadd.f32 %v455, %v627
    %v629 = vpop.f32.mrf.mxu0
    %v630 = vpop.f32.mrf.mxu0
    %631 = vdwg.mxu0
    %v640 = vcombine.low %v503, %v505
    %v641 = vcombine.low %v544, %v546
    %v642 = vcombine.low %v585, %v587
    %v643 = vcombine.low %v626, %v628
    %v645 = vunpack.c.l.s4 1966171168
    %v646 = vunpack.c.0.s8 %v645
    %v647 = vlaneseq
    %v648 = vshrl.u32 %v647, 7
    %v649 = vsub.s32 %v646, %v648
    %v650 = vrot.slane %v640, %v649
    %v652 = vunpack.c.l.s4 1966171168
    %v653 = vunpack.c.0.s8 %v652
    %v654 = vlaneseq
    %v655 = vshrl.u32 %v654, 7
    %v656 = vsub.s32 %v653, %v655
    %v657 = vrot.slane %v641, %v656
    %v659 = vunpack.c.l.s4 1966171168
    %v660 = vunpack.c.0.s8 %v659
    %v661 = vlaneseq
    %v662 = vshrl.u32 %v661, 7
    %v663 = vsub.s32 %v660, %v662
    %v664 = vrot.slane %v642, %v663
    %v666 = vunpack.c.l.s4 1966171168
    %v667 = vunpack.c.0.s8 %v666
    %v668 = vlaneseq
    %v669 = vshrl.u32 %v668, 7
    %v670 = vsub.s32 %v667, %v669
    %v671 = vrot.slane %v643, %v670
    %v672 = vcombine.low %v650, %v657
    %v673 = vcombine.low %v664, %v671
    %v675 = vunpack.c.l.s4 1966171168
    %v676 = vunpack.c.0.s8 %v675
    %v677 = vlaneseq
    %v678 = vshrl.u32 %v677, 7
    %v679 = vsub.s32 %v676, %v678
    %v680 = vrot.slane %v672, %v679
    %v682 = vunpack.c.l.s4 1966171168
    %v683 = vunpack.c.0.s8 %v682
    %v684 = vlaneseq
    %v685 = vshrl.u32 %v684, 7
    %v686 = vsub.s32 %v683, %v685
    %v687 = vrot.slane %v673, %v686
    %v688 = vcombine.low %v680, %v687
    %690 = vst [vmem:[#allocation9] sm:$0xff] %v688
    %s691 = smul.u32 0, 1024
    %v692 = vld [vmem:[#allocation4] sm:$0x1]
    %vm693 = vcmask 1040384
    %v694 = vsel %vm693, %v503, -inf
    %v695 = vsel %vm693, %v505, -inf
    %v696 = vsel %vm693, %v544, -inf
    %v697 = vsel %vm693, %v546, -inf
    %v698 = vsel %vm693, %v585, -inf
    %v699 = vmax.f32 %v694, %v698
    %v700 = vsel %vm693, %v587, -inf
    %v701 = vmax.f32 %v695, %v700
    %v702 = vsel %vm693, %v626, -inf
    %v703 = vmax.f32 %v696, %v702
    %v704 = vsel %vm693, %v628, -inf
    %v705 = vmax.f32 %v697, %v704
    %v706 = vmax.f32 %v699, %v701
    %v707 = vmax.f32 %v703, %v705
    %v708 = vmax.f32 %v706, %v707
    %709 = vmax.xlane.f32.xlu0 %v708
    %v710 = vpop.xlane.xlu0 %709
    %v711 = vmax.f32 %v692, %v710
    %v712 = vsub.f32 %v692, %v711
    %v713 = vmul.f32 %v712, 1.442695
    %v714 = vpow.pop %v713
    %716 = vset.pattern.permute.xlu0 0
    %717 = vperm.xlu0 %716, %v711
    %v718 = vpop.permute.xlu0 %717
    %v720 = vlaneseq
    %v721 = vshrl.u32 %v720, 7
    %v722 = vsub.s32 0, %v721
    %v723 = vrot.slane %v718, %v722
    %v724 = vsub.f32 %v503, %v723
    %v725 = vsub.f32 %v505, %v723
    %v726 = vsub.f32 %v544, %v723
    %v727 = vsub.f32 %v546, %v723
    %v728 = vsub.f32 %v585, %v723
    %v729 = vsub.f32 %v587, %v723
    %v730 = vsub.f32 %v626, %v723
    %v731 = vsub.f32 %v628, %v723
    %v732 = vmul.f32 %v724, 1.442695
    %v733 = vpow.pop %v732
    %v734 = vmul.f32 %v725, 1.442695
    %v735 = vpow.pop %v734
    %v736 = vmul.f32 %v726, 1.442695
    %v737 = vpow.pop %v736
    %v738 = vmul.f32 %v727, 1.442695
    %v739 = vpow.pop %v738
    %v740 = vmul.f32 %v728, 1.442695
    %v741 = vpow.pop %v740
    %v742 = vmul.f32 %v729, 1.442695
    %v743 = vpow.pop %v742
    %v744 = vmul.f32 %v730, 1.442695
    %v745 = vpow.pop %v744
    %v746 = vmul.f32 %v731, 1.442695
    %v747 = vpow.pop %v746
    %v748 = vpack.c.bf16 %v733, %v733
    %v749 = vpack.c.bf16 %v735, %v735
    %v750 = vpack.c.bf16 %v737, %v737
    %v751 = vpack.c.bf16 %v739, %v739
    %v752 = vpack.c.bf16 %v741, %v741
    %v753 = vpack.c.bf16 %v743, %v743
    %v754 = vpack.c.bf16 %v745, %v745
    %v755 = vpack.c.bf16 %v747, %v747
    %v756 = vlaneseq
    %v757 = vshrl.u32 %v756, 7
    %v758 = vadd.s32 %v757, 8
    %v759 = vadd.s32 %v757, 16
    %v760 = vadd.s32 %v757, 24
    %v761 = vadd.s32 %v757, 32
    %v762 = vadd.s32 %v757, 40
    %v763 = vadd.s32 %v757, 48
    %v764 = vadd.s32 %v757, 56
    %v765 = vadd.s32 %v757, 64
    %v766 = vadd.s32 %v757, 72
    %v767 = vadd.s32 %v757, 80
    %v768 = vadd.s32 %v757, 88
    %v769 = vadd.s32 %v757, 96
    %v770 = vadd.s32 %v757, 104
    %v771 = vadd.s32 %v757, 112
    %v772 = vadd.s32 %v757, 120
    %v773 = vadd.s32 %v757, 128
    %v774 = vadd.s32 %v757, 136
    %v775 = vadd.s32 %v757, 144
    %v776 = vadd.s32 %v757, 152
    %v777 = vadd.s32 %v757, 160
    %v778 = vadd.s32 %v757, 168
    %v779 = vadd.s32 %v757, 176
    %v780 = vadd.s32 %v757, 184
    %v781 = vadd.s32 %v757, 192
    %v782 = vadd.s32 %v757, 200
    %v783 = vadd.s32 %v757, 208
    %v784 = vadd.s32 %v757, 216
    %v785 = vadd.s32 %v757, 224
    %v786 = vadd.s32 %v757, 232
    %v787 = vadd.s32 %v757, 240
    %v788 = vadd.s32 %v757, 248
    %v789 = vadd.s32 %v757, 256
    %v790 = vadd.s32 %v757, 264
    %v791 = vadd.s32 %v757, 272
    %v792 = vadd.s32 %v757, 280
    %v793 = vadd.s32 %v757, 288
    %v794 = vadd.s32 %v757, 296
    %v795 = vadd.s32 %v757, 304
    %v796 = vadd.s32 %v757, 312
    %v797 = vadd.s32 %v757, 320
    %v798 = vadd.s32 %v757, 328
    %v799 = vadd.s32 %v757, 336
    %v800 = vadd.s32 %v757, 344
    %v801 = vadd.s32 %v757, 352
    %v802 = vadd.s32 %v757, 360
    %v803 = vadd.s32 %v757, 368
    %v804 = vadd.s32 %v757, 376
    %v805 = vadd.s32 %v757, 384
    %v806 = vadd.s32 %v757, 392
    %v807 = vadd.s32 %v757, 400
    %v808 = vadd.s32 %v757, 408
    %v809 = vadd.s32 %v757, 416
    %v810 = vadd.s32 %v757, 424
    %v811 = vadd.s32 %v757, 432
    %v812 = vadd.s32 %v757, 440
    %v813 = vadd.s32 %v757, 448
    %v814 = vadd.s32 %v757, 456
    %v815 = vadd.s32 %v757, 464
    %v816 = vadd.s32 %v757, 472
    %v817 = vadd.s32 %v757, 480
    %v818 = vadd.s32 %v757, 488
    %v819 = vadd.s32 %v757, 496
    %v820 = vadd.s32 %v757, 504
    %v821 = vadd.s32 %v757, 512
    %v822 = vadd.s32 %v757, 520
    %v823 = vadd.s32 %v757, 528
    %v824 = vadd.s32 %v757, 536
    %v825 = vadd.s32 %v757, 544
    %v826 = vadd.s32 %v757, 552
    %v827 = vadd.s32 %v757, 560
    %v828 = vadd.s32 %v757, 568
    %v829 = vadd.s32 %v757, 576
    %v830 = vadd.s32 %v757, 584
    %v831 = vadd.s32 %v757, 592
    %v832 = vadd.s32 %v757, 600
    %v833 = vadd.s32 %v757, 608
    %v834 = vadd.s32 %v757, 616
    %v835 = vadd.s32 %v757, 624
    %v836 = vadd.s32 %v757, 632
    %v837 = vadd.s32 %v757, 640
    %v838 = vadd.s32 %v757, 648
    %v839 = vadd.s32 %v757, 656
    %v840 = vadd.s32 %v757, 664
    %v841 = vadd.s32 %v757, 672
    %v842 = vadd.s32 %v757, 680
    %v843 = vadd.s32 %v757, 688
    %v844 = vadd.s32 %v757, 696
    %v845 = vadd.s32 %v757, 704
    %v846 = vadd.s32 %v757, 712
    %v847 = vadd.s32 %v757, 720
    %v848 = vadd.s32 %v757, 728
    %v849 = vadd.s32 %v757, 736
    %v850 = vadd.s32 %v757, 744
    %v851 = vadd.s32 %v757, 752
    %v852 = vadd.s32 %v757, 760
    %v853 = vadd.s32 %v757, 768
    %v854 = vadd.s32 %v757, 776
    %v855 = vadd.s32 %v757, 784
    %v856 = vadd.s32 %v757, 792
    %v857 = vadd.s32 %v757, 800
    %v858 = vadd.s32 %v757, 808
    %v859 = vadd.s32 %v757, 816
    %v860 = vadd.s32 %v757, 824
    %v861 = vadd.s32 %v757, 832
    %v862 = vadd.s32 %v757, 840
    %v863 = vadd.s32 %v757, 848
    %v864 = vadd.s32 %v757, 856
    %v865 = vadd.s32 %v757, 864
    %v866 = vadd.s32 %v757, 872
    %v867 = vadd.s32 %v757, 880
    %v868 = vadd.s32 %v757, 888
    %v869 = vadd.s32 %v757, 896
    %v870 = vadd.s32 %v757, 904
    %v871 = vadd.s32 %v757, 912
    %v872 = vadd.s32 %v757, 920
    %v873 = vadd.s32 %v757, 928
    %v874 = vadd.s32 %v757, 936
    %v875 = vadd.s32 %v757, 944
    %v876 = vadd.s32 %v757, 952
    %v877 = vadd.s32 %v757, 960
    %v878 = vadd.s32 %v757, 968
    %v879 = vadd.s32 %v757, 976
    %v880 = vadd.s32 %v757, 984
    %v881 = vadd.s32 %v757, 992
    %v882 = vadd.s32 %v757, 1000
    %v883 = vadd.s32 %v757, 1008
    %v884 = vadd.s32 %v757, 1016
    %v885 = vld [vmem:[%s7] sm:$0x1]
    %v886 = vstv %s691
    %v887 = vsub.s32 %v885, %v886
    %v888 = vld [vmem:[%s8] sm:$0x1]
    %v889 = vsub.s32 %v888, %v886
    %v890 = vlaneseq
    %v891 = vshrl.u32 %v890, 7
    %v892 = vsub.s32 0, %v891
    %v893 = vrot.slane %v887, %v892
    %vm894 = vcmp.gt.s32.totalorder %v757, %v893
    %vm895 = vcmp.gt.s32.totalorder %v758, %v893
    %vm896 = vcmp.gt.s32.totalorder %v759, %v893
    %vm897 = vcmp.gt.s32.totalorder %v760, %v893
    %vm898 = vcmp.gt.s32.totalorder %v761, %v893
    %vm899 = vcmp.gt.s32.totalorder %v762, %v893
    %vm900 = vcmp.gt.s32.totalorder %v763, %v893
    %vm901 = vcmp.gt.s32.totalorder %v764, %v893
    %vm902 = vcmp.gt.s32.totalorder %v765, %v893
    %vm903 = vcmp.gt.s32.totalorder %v766, %v893
    %vm904 = vcmp.gt.s32.totalorder %v767, %v893
    %vm905 = vcmp.gt.s32.totalorder %v768, %v893
    %vm906 = vcmp.gt.s32.totalorder %v769, %v893
    %vm907 = vcmp.gt.s32.totalorder %v770, %v893
    %vm908 = vcmp.gt.s32.totalorder %v771, %v893
    %vm909 = vcmp.gt.s32.totalorder %v772, %v893
    %vm910 = vcmp.gt.s32.totalorder %v773, %v893
    %vm911 = vcmp.gt.s32.totalorder %v774, %v893
    %vm912 = vcmp.gt.s32.totalorder %v775, %v893
    %vm913 = vcmp.gt.s32.totalorder %v776, %v893
    %vm914 = vcmp.gt.s32.totalorder %v777, %v893
    %vm915 = vcmp.gt.s32.totalorder %v778, %v893
    %vm916 = vcmp.gt.s32.totalorder %v779, %v893
    %vm917 = vcmp.gt.s32.totalorder %v780, %v893
    %vm918 = vcmp.gt.s32.totalorder %v781, %v893
    %vm919 = vcmp.gt.s32.totalorder %v782, %v893
    %vm920 = vcmp.gt.s32.totalorder %v783, %v893
    %vm921 = vcmp.gt.s32.totalorder %v784, %v893
    %vm922 = vcmp.gt.s32.totalorder %v785, %v893
    %vm923 = vcmp.gt.s32.totalorder %v786, %v893
    %vm924 = vcmp.gt.s32.totalorder %v787, %v893
    %vm925 = vcmp.gt.s32.totalorder %v788, %v893
    %vm926 = vcmp.gt.s32.totalorder %v789, %v893
    %vm927 = vcmp.gt.s32.totalorder %v790, %v893
    %vm928 = vcmp.gt.s32.totalorder %v791, %v893
    %vm929 = vcmp.gt.s32.totalorder %v792, %v893
    %vm930 = vcmp.gt.s32.totalorder %v793, %v893
    %vm931 = vcmp.gt.s32.totalorder %v794, %v893
    %vm932 = vcmp.gt.s32.totalorder %v795, %v893
    %vm933 = vcmp.gt.s32.totalorder %v796, %v893
    %vm934 = vcmp.gt.s32.totalorder %v797, %v893
    %vm935 = vcmp.gt.s32.totalorder %v798, %v893
    %vm936 = vcmp.gt.s32.totalorder %v799, %v893
    %vm937 = vcmp.gt.s32.totalorder %v800, %v893
    %vm938 = vcmp.gt.s32.totalorder %v801, %v893
    %vm939 = vcmp.gt.s32.totalorder %v802, %v893
    %vm940 = vcmp.gt.s32.totalorder %v803, %v893
    %vm941 = vcmp.gt.s32.totalorder %v804, %v893
    %vm942 = vcmp.gt.s32.totalorder %v805, %v893
    %vm943 = vcmp.gt.s32.totalorder %v806, %v893
    %vm944 = vcmp.gt.s32.totalorder %v807, %v893
    %vm945 = vcmp.gt.s32.totalorder %v808, %v893
    %vm946 = vcmp.gt.s32.totalorder %v809, %v893
    %vm947 = vcmp.gt.s32.totalorder %v810, %v893
    %vm948 = vcmp.gt.s32.totalorder %v811, %v893
    %vm949 = vcmp.gt.s32.totalorder %v812, %v893
    %vm950 = vcmp.gt.s32.totalorder %v813, %v893
    %vm951 = vcmp.gt.s32.totalorder %v814, %v893
    %vm952 = vcmp.gt.s32.totalorder %v815, %v893
    %vm953 = vcmp.gt.s32.totalorder %v816, %v893
    %vm954 = vcmp.gt.s32.totalorder %v817, %v893
    %vm955 = vcmp.gt.s32.totalorder %v818, %v893
    %vm956 = vcmp.gt.s32.totalorder %v819, %v893
    %vm957 = vcmp.gt.s32.totalorder %v820, %v893
    %vm958 = vcmp.gt.s32.totalorder %v821, %v893
    %vm959 = vcmp.gt.s32.totalorder %v822, %v893
    %vm960 = vcmp.gt.s32.totalorder %v823, %v893
    %vm961 = vcmp.gt.s32.totalorder %v824, %v893
    %vm962 = vcmp.gt.s32.totalorder %v825, %v893
    %vm963 = vcmp.gt.s32.totalorder %v826, %v893
    %vm964 = vcmp.gt.s32.totalorder %v827, %v893
    %vm965 = vcmp.gt.s32.totalorder %v828, %v893
    %vm966 = vcmp.gt.s32.totalorder %v829, %v893
    %vm967 = vcmp.gt.s32.totalorder %v830, %v893
    %vm968 = vcmp.gt.s32.totalorder %v831, %v893
    %vm969 = vcmp.gt.s32.totalorder %v832, %v893
    %vm970 = vcmp.gt.s32.totalorder %v833, %v893
    %vm971 = vcmp.gt.s32.totalorder %v834, %v893
    %vm972 = vcmp.gt.s32.totalorder %v835, %v893
    %vm973 = vcmp.gt.s32.totalorder %v836, %v893
    %vm974 = vcmp.gt.s32.totalorder %v837, %v893
    %vm975 = vcmp.gt.s32.totalorder %v838, %v893
    %vm976 = vcmp.gt.s32.totalorder %v839, %v893
    %vm977 = vcmp.gt.s32.totalorder %v840, %v893
    %vm978 = vcmp.gt.s32.totalorder %v841, %v893
    %vm979 = vcmp.gt.s32.totalorder %v842, %v893
    %vm980 = vcmp.gt.s32.totalorder %v843, %v893
    %vm981 = vcmp.gt.s32.totalorder %v844, %v893
    %vm982 = vcmp.gt.s32.totalorder %v845, %v893
    %vm983 = vcmp.gt.s32.totalorder %v846, %v893
    %vm984 = vcmp.gt.s32.totalorder %v847, %v893
    %vm985 = vcmp.gt.s32.totalorder %v848, %v893
    %vm986 = vcmp.gt.s32.totalorder %v849, %v893
    %vm987 = vcmp.gt.s32.totalorder %v850, %v893
    %vm988 = vcmp.gt.s32.totalorder %v851, %v893
    %vm989 = vcmp.gt.s32.totalorder %v852, %v893
    %vm990 = vcmp.gt.s32.totalorder %v853, %v893
    %vm991 = vcmp.gt.s32.totalorder %v854, %v893
    %vm992 = vcmp.gt.s32.totalorder %v855, %v893
    %vm993 = vcmp.gt.s32.totalorder %v856, %v893
    %vm994 = vcmp.gt.s32.totalorder %v857, %v893
    %vm995 = vcmp.gt.s32.totalorder %v858, %v893
    %vm996 = vcmp.gt.s32.totalorder %v859, %v893
    %vm997 = vcmp.gt.s32.totalorder %v860, %v893
    %vm998 = vcmp.gt.s32.totalorder %v861, %v893
    %vm999 = vcmp.gt.s32.totalorder %v862, %v893
    %vm1000 = vcmp.gt.s32.totalorder %v863, %v893
    %vm1001 = vcmp.gt.s32.totalorder %v864, %v893
    %vm1002 = vcmp.gt.s32.totalorder %v865, %v893
    %vm1003 = vcmp.gt.s32.totalorder %v866, %v893
    %vm1004 = vcmp.gt.s32.totalorder %v867, %v893
    %vm1005 = vcmp.gt.s32.totalorder %v868, %v893
    %vm1006 = vcmp.gt.s32.totalorder %v869, %v893
    %vm1007 = vcmp.gt.s32.totalorder %v870, %v893
    %vm1008 = vcmp.gt.s32.totalorder %v871, %v893
    %vm1009 = vcmp.gt.s32.totalorder %v872, %v893
    %vm1010 = vcmp.gt.s32.totalorder %v873, %v893
    %vm1011 = vcmp.gt.s32.totalorder %v874, %v893
    %vm1012 = vcmp.gt.s32.totalorder %v875, %v893
    %vm1013 = vcmp.gt.s32.totalorder %v876, %v893
    %vm1014 = vcmp.gt.s32.totalorder %v877, %v893
    %vm1015 = vcmp.gt.s32.totalorder %v878, %v893
    %vm1016 = vcmp.gt.s32.totalorder %v879, %v893
    %vm1017 = vcmp.gt.s32.totalorder %v880, %v893
    %vm1018 = vcmp.gt.s32.totalorder %v881, %v893
    %vm1019 = vcmp.gt.s32.totalorder %v882, %v893
    %vm1020 = vcmp.gt.s32.totalorder %v883, %v893
    %vm1021 = vcmp.gt.s32.totalorder %v884, %v893
    %v1022 = vlaneseq
    %v1023 = vshrl.u32 %v1022, 7
    %v1024 = vsub.s32 0, %v1023
    %v1025 = vrot.slane %v889, %v1024
    %vm1026 = vcmp.le.s32.totalorder %v757, %v1025
    %vm1027 = vcmp.le.s32.totalorder %v758, %v1025
    %vm1028 = vcmp.le.s32.totalorder %v759, %v1025
    %vm1029 = vcmp.le.s32.totalorder %v760, %v1025
    %vm1030 = vcmp.le.s32.totalorder %v761, %v1025
    %vm1031 = vcmp.le.s32.totalorder %v762, %v1025
    %vm1032 = vcmp.le.s32.totalorder %v763, %v1025
    %vm1033 = vcmp.le.s32.totalorder %v764, %v1025
    %vm1034 = vcmp.le.s32.totalorder %v765, %v1025
    %vm1035 = vcmp.le.s32.totalorder %v766, %v1025
    %vm1036 = vcmp.le.s32.totalorder %v767, %v1025
    %vm1037 = vcmp.le.s32.totalorder %v768, %v1025
    %vm1038 = vcmp.le.s32.totalorder %v769, %v1025
    %vm1039 = vcmp.le.s32.totalorder %v770, %v1025
    %vm1040 = vcmp.le.s32.totalorder %v771, %v1025
    %vm1041 = vcmp.le.s32.totalorder %v772, %v1025
    %vm1042 = vcmp.le.s32.totalorder %v773, %v1025
    %vm1043 = vcmp.le.s32.totalorder %v774, %v1025
    %vm1044 = vcmp.le.s32.totalorder %v775, %v1025
    %vm1045 = vcmp.le.s32.totalorder %v776, %v1025
    %vm1046 = vcmp.le.s32.totalorder %v777, %v1025
    %vm1047 = vcmp.le.s32.totalorder %v778, %v1025
    %vm1048 = vcmp.le.s32.totalorder %v779, %v1025
    %vm1049 = vcmp.le.s32.totalorder %v780, %v1025
    %vm1050 = vcmp.le.s32.totalorder %v781, %v1025
    %vm1051 = vcmp.le.s32.totalorder %v782, %v1025
    %vm1052 = vcmp.le.s32.totalorder %v783, %v1025
    %vm1053 = vcmp.le.s32.totalorder %v784, %v1025
    %vm1054 = vcmp.le.s32.totalorder %v785, %v1025
    %vm1055 = vcmp.le.s32.totalorder %v786, %v1025
    %vm1056 = vcmp.le.s32.totalorder %v787, %v1025
    %vm1057 = vcmp.le.s32.totalorder %v788, %v1025
    %vm1058 = vcmp.le.s32.totalorder %v789, %v1025
    %vm1059 = vcmp.le.s32.totalorder %v790, %v1025
    %vm1060 = vcmp.le.s32.totalorder %v791, %v1025
    %vm1061 = vcmp.le.s32.totalorder %v792, %v1025
    %vm1062 = vcmp.le.s32.totalorder %v793, %v1025
    %vm1063 = vcmp.le.s32.totalorder %v794, %v1025
    %vm1064 = vcmp.le.s32.totalorder %v795, %v1025
    %vm1065 = vcmp.le.s32.totalorder %v796, %v1025
    %vm1066 = vcmp.le.s32.totalorder %v797, %v1025
    %vm1067 = vcmp.le.s32.totalorder %v798, %v1025
    %vm1068 = vcmp.le.s32.totalorder %v799, %v1025
    %vm1069 = vcmp.le.s32.totalorder %v800, %v1025
    %vm1070 = vcmp.le.s32.totalorder %v801, %v1025
    %vm1071 = vcmp.le.s32.totalorder %v802, %v1025
    %vm1072 = vcmp.le.s32.totalorder %v803, %v1025
    %vm1073 = vcmp.le.s32.totalorder %v804, %v1025
    %vm1074 = vcmp.le.s32.totalorder %v805, %v1025
    %vm1075 = vcmp.le.s32.totalorder %v806, %v1025
    %vm1076 = vcmp.le.s32.totalorder %v807, %v1025
    %vm1077 = vcmp.le.s32.totalorder %v808, %v1025
    %vm1078 = vcmp.le.s32.totalorder %v809, %v1025
    %vm1079 = vcmp.le.s32.totalorder %v810, %v1025
    %vm1080 = vcmp.le.s32.totalorder %v811, %v1025
    %vm1081 = vcmp.le.s32.totalorder %v812, %v1025
    %vm1082 = vcmp.le.s32.totalorder %v813, %v1025
    %vm1083 = vcmp.le.s32.totalorder %v814, %v1025
    %vm1084 = vcmp.le.s32.totalorder %v815, %v1025
    %vm1085 = vcmp.le.s32.totalorder %v816, %v1025
    %vm1086 = vcmp.le.s32.totalorder %v817, %v1025
    %vm1087 = vcmp.le.s32.totalorder %v818, %v1025
    %vm1088 = vcmp.le.s32.totalorder %v819, %v1025
    %vm1089 = vcmp.le.s32.totalorder %v820, %v1025
    %vm1090 = vcmp.le.s32.totalorder %v821, %v1025
    %vm1091 = vcmp.le.s32.totalorder %v822, %v1025
    %vm1092 = vcmp.le.s32.totalorder %v823, %v1025
    %vm1093 = vcmp.le.s32.totalorder %v824, %v1025
    %vm1094 = vcmp.le.s32.totalorder %v825, %v1025
    %vm1095 = vcmp.le.s32.totalorder %v826, %v1025
    %vm1096 = vcmp.le.s32.totalorder %v827, %v1025
    %vm1097 = vcmp.le.s32.totalorder %v828, %v1025
    %vm1098 = vcmp.le.s32.totalorder %v829, %v1025
    %vm1099 = vcmp.le.s32.totalorder %v830, %v1025
    %vm1100 = vcmp.le.s32.totalorder %v831, %v1025
    %vm1101 = vcmp.le.s32.totalorder %v832, %v1025
    %vm1102 = vcmp.le.s32.totalorder %v833, %v1025
    %vm1103 = vcmp.le.s32.totalorder %v834, %v1025
    %vm1104 = vcmp.le.s32.totalorder %v835, %v1025
    %vm1105 = vcmp.le.s32.totalorder %v836, %v1025
    %vm1106 = vcmp.le.s32.totalorder %v837, %v1025
    %vm1107 = vcmp.le.s32.totalorder %v838, %v1025
    %vm1108 = vcmp.le.s32.totalorder %v839, %v1025
    %vm1109 = vcmp.le.s32.totalorder %v840, %v1025
    %vm1110 = vcmp.le.s32.totalorder %v841, %v1025
    %vm1111 = vcmp.le.s32.totalorder %v842, %v1025
    %vm1112 = vcmp.le.s32.totalorder %v843, %v1025
    %vm1113 = vcmp.le.s32.totalorder %v844, %v1025
    %vm1114 = vcmp.le.s32.totalorder %v845, %v1025
    %vm1115 = vcmp.le.s32.totalorder %v846, %v1025
    %vm1116 = vcmp.le.s32.totalorder %v847, %v1025
    %vm1117 = vcmp.le.s32.totalorder %v848, %v1025
    %vm1118 = vcmp.le.s32.totalorder %v849, %v1025
    %vm1119 = vcmp.le.s32.totalorder %v850, %v1025
    %vm1120 = vcmp.le.s32.totalorder %v851, %v1025
    %vm1121 = vcmp.le.s32.totalorder %v852, %v1025
    %vm1122 = vcmp.le.s32.totalorder %v853, %v1025
    %vm1123 = vcmp.le.s32.totalorder %v854, %v1025
    %vm1124 = vcmp.le.s32.totalorder %v855, %v1025
    %vm1125 = vcmp.le.s32.totalorder %v856, %v1025
    %vm1126 = vcmp.le.s32.totalorder %v857, %v1025
    %vm1127 = vcmp.le.s32.totalorder %v858, %v1025
    %vm1128 = vcmp.le.s32.totalorder %v859, %v1025
    %vm1129 = vcmp.le.s32.totalorder %v860, %v1025
    %vm1130 = vcmp.le.s32.totalorder %v861, %v1025
    %vm1131 = vcmp.le.s32.totalorder %v862, %v1025
    %vm1132 = vcmp.le.s32.totalorder %v863, %v1025
    %vm1133 = vcmp.le.s32.totalorder %v864, %v1025
    %vm1134 = vcmp.le.s32.totalorder %v865, %v1025
    %vm1135 = vcmp.le.s32.totalorder %v866, %v1025
    %vm1136 = vcmp.le.s32.totalorder %v867, %v1025
    %vm1137 = vcmp.le.s32.totalorder %v868, %v1025
    %vm1138 = vcmp.le.s32.totalorder %v869, %v1025
    %vm1139 = vcmp.le.s32.totalorder %v870, %v1025
    %vm1140 = vcmp.le.s32.totalorder %v871, %v1025
    %vm1141 = vcmp.le.s32.totalorder %v872, %v1025
    %vm1142 = vcmp.le.s32.totalorder %v873, %v1025
    %vm1143 = vcmp.le.s32.totalorder %v874, %v1025
    %vm1144 = vcmp.le.s32.totalorder %v875, %v1025
    %vm1145 = vcmp.le.s32.totalorder %v876, %v1025
    %vm1146 = vcmp.le.s32.totalorder %v877, %v1025
    %vm1147 = vcmp.le.s32.totalorder %v878, %v1025
    %vm1148 = vcmp.le.s32.totalorder %v879, %v1025
    %vm1149 = vcmp.le.s32.totalorder %v880, %v1025
    %vm1150 = vcmp.le.s32.totalorder %v881, %v1025
    %vm1151 = vcmp.le.s32.totalorder %v882, %v1025
    %vm1152 = vcmp.le.s32.totalorder %v883, %v1025
    %vm1153 = vcmp.le.s32.totalorder %v884, %v1025
    %vm1154 = vmand %vm894, %vm1026
    %vm1155 = vmand %vm895, %vm1027
    %vm1156 = vmand %vm896, %vm1028
    %vm1157 = vmand %vm897, %vm1029
    %vm1158 = vmand %vm898, %vm1030
    %vm1159 = vmand %vm899, %vm1031
    %vm1160 = vmand %vm900, %vm1032
    %vm1161 = vmand %vm901, %vm1033
    %vm1162 = vmand %vm902, %vm1034
    %vm1163 = vmand %vm903, %vm1035
    %vm1164 = vmand %vm904, %vm1036
    %vm1165 = vmand %vm905, %vm1037
    %vm1166 = vmand %vm906, %vm1038
    %vm1167 = vmand %vm907, %vm1039
    %vm1168 = vmand %vm908, %vm1040
    %vm1169 = vmand %vm909, %vm1041
    %vm1170 = vmand %vm910, %vm1042
    %vm1171 = vmand %vm911, %vm1043
    %vm1172 = vmand %vm912, %vm1044
    %vm1173 = vmand %vm913, %vm1045
    %vm1174 = vmand %vm914, %vm1046
    %vm1175 = vmand %vm915, %vm1047
    %vm1176 = vmand %vm916, %vm1048
    %vm1177 = vmand %vm917, %vm1049
    %vm1178 = vmand %vm918, %vm1050
    %vm1179 = vmand %vm919, %vm1051
    %vm1180 = vmand %vm920, %vm1052
    %vm1181 = vmand %vm921, %vm1053
    %vm1182 = vmand %vm922, %vm1054
    %vm1183 = vmand %vm923, %vm1055
    %vm1184 = vmand %vm924, %vm1056
    %vm1185 = vmand %vm925, %vm1057
    %vm1186 = vmand %vm926, %vm1058
    %vm1187 = vmand %vm927, %vm1059
    %vm1188 = vmand %vm928, %vm1060
    %vm1189 = vmand %vm929, %vm1061
    %vm1190 = vmand %vm930, %vm1062
    %vm1191 = vmand %vm931, %vm1063
    %vm1192 = vmand %vm932, %vm1064
    %vm1193 = vmand %vm933, %vm1065
    %vm1194 = vmand %vm934, %vm1066
    %vm1195 = vmand %vm935, %vm1067
    %vm1196 = vmand %vm936, %vm1068
    %vm1197 = vmand %vm937, %vm1069
    %vm1198 = vmand %vm938, %vm1070
    %vm1199 = vmand %vm939, %vm1071
    %vm1200 = vmand %vm940, %vm1072
    %vm1201 = vmand %vm941, %vm1073
    %vm1202 = vmand %vm942, %vm1074
    %vm1203 = vmand %vm943, %vm1075
    %vm1204 = vmand %vm944, %vm1076
    %vm1205 = vmand %vm945, %vm1077
    %vm1206 = vmand %vm946, %vm1078
    %vm1207 = vmand %vm947, %vm1079
    %vm1208 = vmand %vm948, %vm1080
    %vm1209 = vmand %vm949, %vm1081
    %vm1210 = vmand %vm950, %vm1082
    %vm1211 = vmand %vm951, %vm1083
    %vm1212 = vmand %vm952, %vm1084
    %vm1213 = vmand %vm953, %vm1085
    %vm1214 = vmand %vm954, %vm1086
    %vm1215 = vmand %vm955, %vm1087
    %vm1216 = vmand %vm956, %vm1088
    %vm1217 = vmand %vm957, %vm1089
    %vm1218 = vmand %vm958, %vm1090
    %vm1219 = vmand %vm959, %vm1091
    %vm1220 = vmand %vm960, %vm1092
    %vm1221 = vmand %vm961, %vm1093
    %vm1222 = vmand %vm962, %vm1094
    %vm1223 = vmand %vm963, %vm1095
    %vm1224 = vmand %vm964, %vm1096
    %vm1225 = vmand %vm965, %vm1097
    %vm1226 = vmand %vm966, %vm1098
    %vm1227 = vmand %vm967, %vm1099
    %vm1228 = vmand %vm968, %vm1100
    %vm1229 = vmand %vm969, %vm1101
    %vm1230 = vmand %vm970, %vm1102
    %vm1231 = vmand %vm971, %vm1103
    %vm1232 = vmand %vm972, %vm1104
    %vm1233 = vmand %vm973, %vm1105
    %vm1234 = vmand %vm974, %vm1106
    %vm1235 = vmand %vm975, %vm1107
    %vm1236 = vmand %vm976, %vm1108
    %vm1237 = vmand %vm977, %vm1109
    %vm1238 = vmand %vm978, %vm1110
    %vm1239 = vmand %vm979, %vm1111
    %vm1240 = vmand %vm980, %vm1112
    %vm1241 = vmand %vm981, %vm1113
    %vm1242 = vmand %vm982, %vm1114
    %vm1243 = vmand %vm983, %vm1115
    %vm1244 = vmand %vm984, %vm1116
    %vm1245 = vmand %vm985, %vm1117
    %vm1246 = vmand %vm986, %vm1118
    %vm1247 = vmand %vm987, %vm1119
    %vm1248 = vmand %vm988, %vm1120
    %vm1249 = vmand %vm989, %vm1121
    %vm1250 = vmand %vm990, %vm1122
    %vm1251 = vmand %vm991, %vm1123
    %vm1252 = vmand %vm992, %vm1124
    %vm1253 = vmand %vm993, %vm1125
    %vm1254 = vmand %vm994, %vm1126
    %vm1255 = vmand %vm995, %vm1127
    %vm1256 = vmand %vm996, %vm1128
    %vm1257 = vmand %vm997, %vm1129
    %vm1258 = vmand %vm998, %vm1130
    %vm1259 = vmand %vm999, %vm1131
    %vm1260 = vmand %vm1000, %vm1132
    %vm1261 = vmand %vm1001, %vm1133
    %vm1262 = vmand %vm1002, %vm1134
    %vm1263 = vmand %vm1003, %vm1135
    %vm1264 = vmand %vm1004, %vm1136
    %vm1265 = vmand %vm1005, %vm1137
    %vm1266 = vmand %vm1006, %vm1138
    %vm1267 = vmand %vm1007, %vm1139
    %vm1268 = vmand %vm1008, %vm1140
    %vm1269 = vmand %vm1009, %vm1141
    %vm1270 = vmand %vm1010, %vm1142
    %vm1271 = vmand %vm1011, %vm1143
    %vm1272 = vmand %vm1012, %vm1144
    %vm1273 = vmand %vm1013, %vm1145
    %vm1274 = vmand %vm1014, %vm1146
    %vm1275 = vmand %vm1015, %vm1147
    %vm1276 = vmand %vm1016, %vm1148
    %vm1277 = vmand %vm1017, %vm1149
    %vm1278 = vmand %vm1018, %vm1150
    %vm1279 = vmand %vm1019, %vm1151
    %vm1280 = vmand %vm1020, %vm1152
    %vm1281 = vmand %vm1021, %vm1153
    %v1282 = vsel %vm1154, 1, 0
    %v1283 = vsel %vm1155, 1, 0
    %v1284 = vsel %vm1156, 1, 0
    %v1285 = vsel %vm1157, 1, 0
    %v1286 = vsel %vm1158, 1, 0
    %v1287 = vsel %vm1159, 1, 0
    %v1288 = vsel %vm1160, 1, 0
    %v1289 = vsel %vm1161, 1, 0
    %v1290 = vsel %vm1162, 1, 0
    %v1291 = vsel %vm1163, 1, 0
    %v1292 = vsel %vm1164, 1, 0
    %v1293 = vsel %vm1165, 1, 0
    %v1294 = vsel %vm1166, 1, 0
    %v1295 = vsel %vm1167, 1, 0
    %v1296 = vsel %vm1168, 1, 0
    %v1297 = vsel %vm1169, 1, 0
    %v1298 = vsel %vm1170, 1, 0
    %v1299 = vsel %vm1171, 1, 0
    %v1300 = vsel %vm1172, 1, 0
    %v1301 = vsel %vm1173, 1, 0
    %v1302 = vsel %vm1174, 1, 0
    %v1303 = vsel %vm1175, 1, 0
    %v1304 = vsel %vm1176, 1, 0
    %v1305 = vsel %vm1177, 1, 0
    %v1306 = vsel %vm1178, 1, 0
    %v1307 = vsel %vm1179, 1, 0
    %v1308 = vsel %vm1180, 1, 0
    %v1309 = vsel %vm1181, 1, 0
    %v1310 = vsel %vm1182, 1, 0
    %v1311 = vsel %vm1183, 1, 0
    %v1312 = vsel %vm1184, 1, 0
    %v1313 = vsel %vm1185, 1, 0
    %v1314 = vsel %vm1186, 1, 0
    %v1315 = vsel %vm1187, 1, 0
    %v1316 = vsel %vm1188, 1, 0
    %v1317 = vsel %vm1189, 1, 0
    %v1318 = vsel %vm1190, 1, 0
    %v1319 = vsel %vm1191, 1, 0
    %v1320 = vsel %vm1192, 1, 0
    %v1321 = vsel %vm1193, 1, 0
    %v1322 = vsel %vm1194, 1, 0
    %v1323 = vsel %vm1195, 1, 0
    %v1324 = vsel %vm1196, 1, 0
    %v1325 = vsel %vm1197, 1, 0
    %v1326 = vsel %vm1198, 1, 0
    %v1327 = vsel %vm1199, 1, 0
    %v1328 = vsel %vm1200, 1, 0
    %v1329 = vsel %vm1201, 1, 0
    %v1330 = vsel %vm1202, 1, 0
    %v1331 = vsel %vm1203, 1, 0
    %v1332 = vsel %vm1204, 1, 0
    %v1333 = vsel %vm1205, 1, 0
    %v1334 = vsel %vm1206, 1, 0
    %v1335 = vsel %vm1207, 1, 0
    %v1336 = vsel %vm1208, 1, 0
    %v1337 = vsel %vm1209, 1, 0
    %v1338 = vsel %vm1210, 1, 0
    %v1339 = vsel %vm1211, 1, 0
    %v1340 = vsel %vm1212, 1, 0
    %v1341 = vsel %vm1213, 1, 0
    %v1342 = vsel %vm1214, 1, 0
    %v1343 = vsel %vm1215, 1, 0
    %v1344 = vsel %vm1216, 1, 0
    %v1345 = vsel %vm1217, 1, 0
    %v1346 = vsel %vm1218, 1, 0
    %v1347 = vsel %vm1219, 1, 0
    %v1348 = vsel %vm1220, 1, 0
    %v1349 = vsel %vm1221, 1, 0
    %v1350 = vsel %vm1222, 1, 0
    %v1351 = vsel %vm1223, 1, 0
    %v1352 = vsel %vm1224, 1, 0
    %v1353 = vsel %vm1225, 1, 0
    %v1354 = vsel %vm1226, 1, 0
    %v1355 = vsel %vm1227, 1, 0
    %v1356 = vsel %vm1228, 1, 0
    %v1357 = vsel %vm1229, 1, 0
    %v1358 = vsel %vm1230, 1, 0
    %v1359 = vsel %vm1231, 1, 0
    %v1360 = vsel %vm1232, 1, 0
    %v1361 = vsel %vm1233, 1, 0
    %v1362 = vsel %vm1234, 1, 0
    %v1363 = vsel %vm1235, 1, 0
    %v1364 = vsel %vm1236, 1, 0
    %v1365 = vsel %vm1237, 1, 0
    %v1366 = vsel %vm1238, 1, 0
    %v1367 = vsel %vm1239, 1, 0
    %v1368 = vsel %vm1240, 1, 0
    %v1369 = vsel %vm1241, 1, 0
    %v1370 = vsel %vm1242, 1, 0
    %v1371 = vsel %vm1243, 1, 0
    %v1372 = vsel %vm1244, 1, 0
    %v1373 = vsel %vm1245, 1, 0
    %v1374 = vsel %vm1246, 1, 0
    %v1375 = vsel %vm1247, 1, 0
    %v1376 = vsel %vm1248, 1, 0
    %v1377 = vsel %vm1249, 1, 0
    %v1378 = vsel %vm1250, 1, 0
    %v1379 = vsel %vm1251, 1, 0
    %v1380 = vsel %vm1252, 1, 0
    %v1381 = vsel %vm1253, 1, 0
    %v1382 = vsel %vm1254, 1, 0
    %v1383 = vsel %vm1255, 1, 0
    %v1384 = vsel %vm1256, 1, 0
    %v1385 = vsel %vm1257, 1, 0
    %v1386 = vsel %vm1258, 1, 0
    %v1387 = vsel %vm1259, 1, 0
    %v1388 = vsel %vm1260, 1, 0
    %v1389 = vsel %vm1261, 1, 0
    %v1390 = vsel %vm1262, 1, 0
    %v1391 = vsel %vm1263, 1, 0
    %v1392 = vsel %vm1264, 1, 0
    %v1393 = vsel %vm1265, 1, 0
    %v1394 = vsel %vm1266, 1, 0
    %v1395 = vsel %vm1267, 1, 0
    %v1396 = vsel %vm1268, 1, 0
    %v1397 = vsel %vm1269, 1, 0
    %v1398 = vsel %vm1270, 1, 0
    %v1399 = vsel %vm1271, 1, 0
    %v1400 = vsel %vm1272, 1, 0
    %v1401 = vsel %vm1273, 1, 0
    %v1402 = vsel %vm1274, 1, 0
    %v1403 = vsel %vm1275, 1, 0
    %v1404 = vsel %vm1276, 1, 0
    %v1405 = vsel %vm1277, 1, 0
    %v1406 = vsel %vm1278, 1, 0
    %v1407 = vsel %vm1279, 1, 0
    %v1408 = vsel %vm1280, 1, 0
    %v1409 = vsel %vm1281, 1, 0
    %v1410 = vcvt.s32.f32 %v1282
    %v1411 = vcvt.s32.f32 %v1283
    %v1412 = vcvt.s32.f32 %v1284
    %v1413 = vcvt.s32.f32 %v1285
    %v1414 = vcvt.s32.f32 %v1286
    %v1415 = vcvt.s32.f32 %v1287
    %v1416 = vcvt.s32.f32 %v1288
    %v1417 = vcvt.s32.f32 %v1289
    %v1418 = vcvt.s32.f32 %v1290
    %v1419 = vcvt.s32.f32 %v1291
    %v1420 = vcvt.s32.f32 %v1292
    %v1421 = vcvt.s32.f32 %v1293
    %v1422 = vcvt.s32.f32 %v1294
    %v1423 = vcvt.s32.f32 %v1295
    %v1424 = vcvt.s32.f32 %v1296
    %v1425 = vcvt.s32.f32 %v1297
    %v1426 = vcvt.s32.f32 %v1298
    %v1427 = vcvt.s32.f32 %v1299
    %v1428 = vcvt.s32.f32 %v1300
    %v1429 = vcvt.s32.f32 %v1301
    %v1430 = vcvt.s32.f32 %v1302
    %v1431 = vcvt.s32.f32 %v1303
    %v1432 = vcvt.s32.f32 %v1304
    %v1433 = vcvt.s32.f32 %v1305
    %v1434 = vcvt.s32.f32 %v1306
    %v1435 = vcvt.s32.f32 %v1307
    %v1436 = vcvt.s32.f32 %v1308
    %v1437 = vcvt.s32.f32 %v1309
    %v1438 = vcvt.s32.f32 %v1310
    %v1439 = vcvt.s32.f32 %v1311
    %v1440 = vcvt.s32.f32 %v1312
    %v1441 = vcvt.s32.f32 %v1313
    %v1442 = vcvt.s32.f32 %v1314
    %v1443 = vcvt.s32.f32 %v1315
    %v1444 = vcvt.s32.f32 %v1316
    %v1445 = vcvt.s32.f32 %v1317
    %v1446 = vcvt.s32.f32 %v1318
    %v1447 = vcvt.s32.f32 %v1319
    %v1448 = vcvt.s32.f32 %v1320
    %v1449 = vcvt.s32.f32 %v1321
    %v1450 = vcvt.s32.f32 %v1322
    %v1451 = vcvt.s32.f32 %v1323
    %v1452 = vcvt.s32.f32 %v1324
    %v1453 = vcvt.s32.f32 %v1325
    %v1454 = vcvt.s32.f32 %v1326
    %v1455 = vcvt.s32.f32 %v1327
    %v1456 = vcvt.s32.f32 %v1328
    %v1457 = vcvt.s32.f32 %v1329
    %v1458 = vcvt.s32.f32 %v1330
    %v1459 = vcvt.s32.f32 %v1331
    %v1460 = vcvt.s32.f32 %v1332
    %v1461 = vcvt.s32.f32 %v1333
    %v1462 = vcvt.s32.f32 %v1334
    %v1463 = vcvt.s32.f32 %v1335
    %v1464 = vcvt.s32.f32 %v1336
    %v1465 = vcvt.s32.f32 %v1337
    %v1466 = vcvt.s32.f32 %v1338
    %v1467 = vcvt.s32.f32 %v1339
    %v1468 = vcvt.s32.f32 %v1340
    %v1469 = vcvt.s32.f32 %v1341
    %v1470 = vcvt.s32.f32 %v1342
    %v1471 = vcvt.s32.f32 %v1343
    %v1472 = vcvt.s32.f32 %v1344
    %v1473 = vcvt.s32.f32 %v1345
    %v1474 = vcvt.s32.f32 %v1346
    %v1475 = vcvt.s32.f32 %v1347
    %v1476 = vcvt.s32.f32 %v1348
    %v1477 = vcvt.s32.f32 %v1349
    %v1478 = vcvt.s32.f32 %v1350
    %v1479 = vcvt.s32.f32 %v1351
    %v1480 = vcvt.s32.f32 %v1352
    %v1481 = vcvt.s32.f32 %v1353
    %v1482 = vcvt.s32.f32 %v1354
    %v1483 = vcvt.s32.f32 %v1355
    %v1484 = vcvt.s32.f32 %v1356
    %v1485 = vcvt.s32.f32 %v1357
    %v1486 = vcvt.s32.f32 %v1358
    %v1487 = vcvt.s32.f32 %v1359
    %v1488 = vcvt.s32.f32 %v1360
    %v1489 = vcvt.s32.f32 %v1361
    %v1490 = vcvt.s32.f32 %v1362
    %v1491 = vcvt.s32.f32 %v1363
    %v1492 = vcvt.s32.f32 %v1364
    %v1493 = vcvt.s32.f32 %v1365
    %v1494 = vcvt.s32.f32 %v1366
    %v1495 = vcvt.s32.f32 %v1367
    %v1496 = vcvt.s32.f32 %v1368
    %v1497 = vcvt.s32.f32 %v1369
    %v1498 = vcvt.s32.f32 %v1370
    %v1499 = vcvt.s32.f32 %v1371
    %v1500 = vcvt.s32.f32 %v1372
    %v1501 = vcvt.s32.f32 %v1373
    %v1502 = vcvt.s32.f32 %v1374
    %v1503 = vcvt.s32.f32 %v1375
    %v1504 = vcvt.s32.f32 %v1376
    %v1505 = vcvt.s32.f32 %v1377
    %v1506 = vcvt.s32.f32 %v1378
    %v1507 = vcvt.s32.f32 %v1379
    %v1508 = vcvt.s32.f32 %v1380
    %v1509 = vcvt.s32.f32 %v1381
    %v1510 = vcvt.s32.f32 %v1382
    %v1511 = vcvt.s32.f32 %v1383
    %v1512 = vcvt.s32.f32 %v1384
    %v1513 = vcvt.s32.f32 %v1385
    %v1514 = vcvt.s32.f32 %v1386
    %v1515 = vcvt.s32.f32 %v1387
    %v1516 = vcvt.s32.f32 %v1388
    %v1517 = vcvt.s32.f32 %v1389
    %v1518 = vcvt.s32.f32 %v1390
    %v1519 = vcvt.s32.f32 %v1391
    %v1520 = vcvt.s32.f32 %v1392
    %v1521 = vcvt.s32.f32 %v1393
    %v1522 = vcvt.s32.f32 %v1394
    %v1523 = vcvt.s32.f32 %v1395
    %v1524 = vcvt.s32.f32 %v1396
    %v1525 = vcvt.s32.f32 %v1397
    %v1526 = vcvt.s32.f32 %v1398
    %v1527 = vcvt.s32.f32 %v1399
    %v1528 = vcvt.s32.f32 %v1400
    %v1529 = vcvt.s32.f32 %v1401
    %v1530 = vcvt.s32.f32 %v1402
    %v1531 = vcvt.s32.f32 %v1403
    %v1532 = vcvt.s32.f32 %v1404
    %v1533 = vcvt.s32.f32 %v1405
    %v1534 = vcvt.s32.f32 %v1406
    %v1535 = vcvt.s32.f32 %v1407
    %v1536 = vcvt.s32.f32 %v1408
    %v1537 = vcvt.s32.f32 %v1409
    %v1538 = vpack.c.bf16 %v1411, %v1410
    %v1539 = vpack.c.bf16 %v1413, %v1412
    %v1540 = vpack.c.bf16 %v1415, %v1414
    %v1541 = vpack.c.bf16 %v1417, %v1416
    %v1542 = vpack.c.bf16 %v1419, %v1418
    %v1543 = vpack.c.bf16 %v1421, %v1420
    %v1544 = vpack.c.bf16 %v1423, %v1422
    %v1545 = vpack.c.bf16 %v1425, %v1424
    %v1546 = vpack.c.bf16 %v1427, %v1426
    %v1547 = vpack.c.bf16 %v1429, %v1428
    %v1548 = vpack.c.bf16 %v1431, %v1430
    %v1549 = vpack.c.bf16 %v1433, %v1432
    %v1550 = vpack.c.bf16 %v1435, %v1434
    %v1551 = vpack.c.bf16 %v1437, %v1436
    %v1552 = vpack.c.bf16 %v1439, %v1438
    %v1553 = vpack.c.bf16 %v1441, %v1440
    %v1554 = vpack.c.bf16 %v1443, %v1442
    %v1555 = vpack.c.bf16 %v1445, %v1444
    %v1556 = vpack.c.bf16 %v1447, %v1446
    %v1557 = vpack.c.bf16 %v1449, %v1448
    %v1558 = vpack.c.bf16 %v1451, %v1450
    %v1559 = vpack.c.bf16 %v1453, %v1452
    %v1560 = vpack.c.bf16 %v1455, %v1454
    %v1561 = vpack.c.bf16 %v1457, %v1456
    %v1562 = vpack.c.bf16 %v1459, %v1458
    %v1563 = vpack.c.bf16 %v1461, %v1460
    %v1564 = vpack.c.bf16 %v1463, %v1462
    %v1565 = vpack.c.bf16 %v1465, %v1464
    %v1566 = vpack.c.bf16 %v1467, %v1466
    %v1567 = vpack.c.bf16 %v1469, %v1468
    %v1568 = vpack.c.bf16 %v1471, %v1470
    %v1569 = vpack.c.bf16 %v1473, %v1472
    %v1570 = vpack.c.bf16 %v1475, %v1474
    %v1571 = vpack.c.bf16 %v1477, %v1476
    %v1572 = vpack.c.bf16 %v1479, %v1478
    %v1573 = vpack.c.bf16 %v1481, %v1480
    %v1574 = vpack.c.bf16 %v1483, %v1482
    %v1575 = vpack.c.bf16 %v1485, %v1484
    %v1576 = vpack.c.bf16 %v1487, %v1486
    %v1577 = vpack.c.bf16 %v1489, %v1488
    %v1578 = vpack.c.bf16 %v1491, %v1490
    %v1579 = vpack.c.bf16 %v1493, %v1492
    %v1580 = vpack.c.bf16 %v1495, %v1494
    %v1581 = vpack.c.bf16 %v1497, %v1496
    %v1582 = vpack.c.bf16 %v1499, %v1498
    %v1583 = vpack.c.bf16 %v1501, %v1500
    %v1584 = vpack.c.bf16 %v1503, %v1502
    %v1585 = vpack.c.bf16 %v1505, %v1504
    %v1586 = vpack.c.bf16 %v1507, %v1506
    %v1587 = vpack.c.bf16 %v1509, %v1508
    %v1588 = vpack.c.bf16 %v1511, %v1510
    %v1589 = vpack.c.bf16 %v1513, %v1512
    %v1590 = vpack.c.bf16 %v1515, %v1514
    %v1591 = vpack.c.bf16 %v1517, %v1516
    %v1592 = vpack.c.bf16 %v1519, %v1518
    %v1593 = vpack.c.bf16 %v1521, %v1520
    %v1594 = vpack.c.bf16 %v1523, %v1522
    %v1595 = vpack.c.bf16 %v1525, %v1524
    %v1596 = vpack.c.bf16 %v1527, %v1526
    %v1597 = vpack.c.bf16 %v1529, %v1528
    %v1598 = vpack.c.bf16 %v1531, %v1530
    %v1599 = vpack.c.bf16 %v1533, %v1532
    %v1600 = vpack.c.bf16 %v1535, %v1534
    %v1601 = vpack.c.bf16 %v1537, %v1536
    %1602 = vmatprep.subr.bf16.mxu0 0
    %1603 = vmatpush1.bf16.msra.mxu0 %v1545
    %1604 = vmatprep.subr.bf16.mxu0 0
    %1605 = vmatpush1.bf16.msra.mxu0 %v1544
    %1606 = vmatprep.subr.bf16.mxu0 0
    %1607 = vmatpush1.bf16.msra.mxu0 %v1543
    %1608 = vmatprep.subr.bf16.mxu0 0
    %1609 = vmatpush1.bf16.msra.mxu0 %v1542
    %1610 = vmatprep.subr.bf16.mxu0 0
    %1611 = vmatpush1.bf16.msra.mxu0 %v1541
    %1612 = vmatprep.subr.bf16.mxu0 0
    %1613 = vmatpush1.bf16.msra.mxu0 %v1540
    %1614 = vmatprep.subr.bf16.mxu0 0
    %1615 = vmatpush1.bf16.msra.mxu0 %v1539
    %1616 = vmatprep.subr.bf16.mxu0 0
    %1617 = vmatpush1.bf16.msra.mxu0 %v1538
    %1618 = vmatprep.subr.bf16.mxu0 0
    %1619 = vmatpush2.bf16.msra.mxu0 %v1553
    %1620 = vmatprep.subr.bf16.mxu0 0
    %1621 = vmatpush2.bf16.msra.mxu0 %v1552
    %1622 = vmatprep.subr.bf16.mxu0 0
    %1623 = vmatpush2.bf16.msra.mxu0 %v1551
    %1624 = vmatprep.subr.bf16.mxu0 0
    %1625 = vmatpush2.bf16.msra.mxu0 %v1550
    %1626 = vmatprep.subr.bf16.mxu0 0
    %1627 = vmatpush2.bf16.msra.mxu0 %v1549
    %1628 = vmatprep.subr.bf16.mxu0 0
    %1629 = vmatpush2.bf16.msra.mxu0 %v1548
    %1630 = vmatprep.subr.bf16.mxu0 0
    %1631 = vmatpush2.bf16.msra.mxu0 %v1547
    %1632 = vmatprep.subr.bf16.mxu0 0
    %1633 = vmatpush2.bf16.msra.mxu0 %v1546
    %1634 = vmatprep.mubr.bf16.mxu0 %v749
    %1635 = vmatmul.mubr.bf16.gmra.mxu0 %v748
    %v1636 = vpop.f32.mrf.mxu0
    %v1637 = vadd.f32 0.0, %v1636
    %v1638 = vpop.f32.mrf.mxu0
    %v1639 = vpop.f32.mrf.mxu0
    %v1640 = vpop.f32.mrf.mxu0
    %1641 = vdwg.mxu0
    %1642 = vmatprep.subr.bf16.mxu0 0
    %1643 = vmatpush1.bf16.msra.mxu0 %v1561
    %1644 = vmatprep.subr.bf16.mxu0 0
    %1645 = vmatpush1.bf16.msra.mxu0 %v1560
    %1646 = vmatprep.subr.bf16.mxu0 0
    %1647 = vmatpush1.bf16.msra.mxu0 %v1559
    %1648 = vmatprep.subr.bf16.mxu0 0
    %1649 = vmatpush1.bf16.msra.mxu0 %v1558
    %1650 = vmatprep.subr.bf16.mxu0 0
    %1651 = vmatpush1.bf16.msra.mxu0 %v1557
    %1652 = vmatprep.subr.bf16.mxu0 0
    %1653 = vmatpush1.bf16.msra.mxu0 %v1556
    %1654 = vmatprep.subr.bf16.mxu0 0
    %1655 = vmatpush1.bf16.msra.mxu0 %v1555
    %1656 = vmatprep.subr.bf16.mxu0 0
    %1657 = vmatpush1.bf16.msra.mxu0 %v1554
    %1658 = vmatprep.subr.bf16.mxu0 0
    %1659 = vmatpush2.bf16.msra.mxu0 %v1569
    %1660 = vmatprep.subr.bf16.mxu0 0
    %1661 = vmatpush2.bf16.msra.mxu0 %v1568
    %1662 = vmatprep.subr.bf16.mxu0 0
    %1663 = vmatpush2.bf16.msra.mxu0 %v1567
    %1664 = vmatprep.subr.bf16.mxu0 0
    %1665 = vmatpush2.bf16.msra.mxu0 %v1566
    %1666 = vmatprep.subr.bf16.mxu0 0
    %1667 = vmatpush2.bf16.msra.mxu0 %v1565
    %1668 = vmatprep.subr.bf16.mxu0 0
    %1669 = vmatpush2.bf16.msra.mxu0 %v1564
    %1670 = vmatprep.subr.bf16.mxu0 0
    %1671 = vmatpush2.bf16.msra.mxu0 %v1563
    %1672 = vmatprep.subr.bf16.mxu0 0
    %1673 = vmatpush2.bf16.msra.mxu0 %v1562
    %1674 = vmatprep.mubr.bf16.mxu0 %v751
    %1675 = vmatmul.mubr.bf16.gmra.mxu0 %v750
    %v1676 = vpop.f32.mrf.mxu0
    %v1677 = vadd.f32 %v1637, %v1676
    %v1678 = vpop.f32.mrf.mxu0
    %v1679 = vpop.f32.mrf.mxu0
    %v1680 = vpop.f32.mrf.mxu0
    %1681 = vdwg.mxu0
    %1682 = vmatprep.subr.bf16.mxu0 0
    %1683 = vmatpush1.bf16.msra.mxu0 %v1577
    %1684 = vmatprep.subr.bf16.mxu0 0
    %1685 = vmatpush1.bf16.msra.mxu0 %v1576
    %1686 = vmatprep.subr.bf16.mxu0 0
    %1687 = vmatpush1.bf16.msra.mxu0 %v1575
    %1688 = vmatprep.subr.bf16.mxu0 0
    %1689 = vmatpush1.bf16.msra.mxu0 %v1574
    %1690 = vmatprep.subr.bf16.mxu0 0
    %1691 = vmatpush1.bf16.msra.mxu0 %v1573
    %1692 = vmatprep.subr.bf16.mxu0 0
    %1693 = vmatpush1.bf16.msra.mxu0 %v1572
    %1694 = vmatprep.subr.bf16.mxu0 0
    %1695 = vmatpush1.bf16.msra.mxu0 %v1571
    %1696 = vmatprep.subr.bf16.mxu0 0
    %1697 = vmatpush1.bf16.msra.mxu0 %v1570
    %1698 = vmatprep.subr.bf16.mxu0 0
    %1699 = vmatpush2.bf16.msra.mxu0 %v1585
    %1700 = vmatprep.subr.bf16.mxu0 0
    %1701 = vmatpush2.bf16.msra.mxu0 %v1584
    %1702 = vmatprep.subr.bf16.mxu0 0
    %1703 = vmatpush2.bf16.msra.mxu0 %v1583
    %1704 = vmatprep.subr.bf16.mxu0 0
    %1705 = vmatpush2.bf16.msra.mxu0 %v1582
    %1706 = vmatprep.subr.bf16.mxu0 0
    %1707 = vmatpush2.bf16.msra.mxu0 %v1581
    %1708 = vmatprep.subr.bf16.mxu0 0
    %1709 = vmatpush2.bf16.msra.mxu0 %v1580
    %1710 = vmatprep.subr.bf16.mxu0 0
    %1711 = vmatpush2.bf16.msra.mxu0 %v1579
    %1712 = vmatprep.subr.bf16.mxu0 0
    %1713 = vmatpush2.bf16.msra.mxu0 %v1578
    %1714 = vmatprep.mubr.bf16.mxu0 %v753
    %1715 = vmatmul.mubr.bf16.gmra.mxu0 %v752
    %v1716 = vpop.f32.mrf.mxu0
    %v1717 = vadd.f32 %v1677, %v1716
    %v1718 = vpop.f32.mrf.mxu0
    %v1719 = vpop.f32.mrf.mxu0
    %v1720 = vpop.f32.mrf.mxu0
    %1721 = vdwg.mxu0
    %1722 = vmatprep.subr.bf16.mxu0 0
    %1723 = vmatpush1.bf16.msra.mxu0 %v1593
    %1724 = vmatprep.subr.bf16.mxu0 0
    %1725 = vmatpush1.bf16.msra.mxu0 %v1592
    %1726 = vmatprep.subr.bf16.mxu0 0
    %1727 = vmatpush1.bf16.msra.mxu0 %v1591
    %1728 = vmatprep.subr.bf16.mxu0 0
    %1729 = vmatpush1.bf16.msra.mxu0 %v1590
    %1730 = vmatprep.subr.bf16.mxu0 0
    %1731 = vmatpush1.bf16.msra.mxu0 %v1589
    %1732 = vmatprep.subr.bf16.mxu0 0
    %1733 = vmatpush1.bf16.msra.mxu0 %v1588
    %1734 = vmatprep.subr.bf16.mxu0 0
    %1735 = vmatpush1.bf16.msra.mxu0 %v1587
    %1736 = vmatprep.subr.bf16.mxu0 0
    %1737 = vmatpush1.bf16.msra.mxu0 %v1586
    %1738 = vmatprep.subr.bf16.mxu0 0
    %1739 = vmatpush2.bf16.msra.mxu0 %v1601
    %1740 = vmatprep.subr.bf16.mxu0 0
    %1741 = vmatpush2.bf16.msra.mxu0 %v1600
    %1742 = vmatprep.subr.bf16.mxu0 0
    %1743 = vmatpush2.bf16.msra.mxu0 %v1599
    %1744 = vmatprep.subr.bf16.mxu0 0
    %1745 = vmatpush2.bf16.msra.mxu0 %v1598
    %1746 = vmatprep.subr.bf16.mxu0 0
    %1747 = vmatpush2.bf16.msra.mxu0 %v1597
    %1748 = vmatprep.subr.bf16.mxu0 0
    %1749 = vmatpush2.bf16.msra.mxu0 %v1596
    %1750 = vmatprep.subr.bf16.mxu0 0
    %1751 = vmatpush2.bf16.msra.mxu0 %v1595
    %1752 = vmatprep.subr.bf16.mxu0 0
    %1753 = vmatpush2.bf16.msra.mxu0 %v1594
    %1754 = vmatprep.mubr.bf16.mxu0 %v755
    %1755 = vmatmul.mubr.bf16.gmra.mxu0 %v754
    %v1756 = vpop.f32.mrf.mxu0
    %v1757 = vadd.f32 %v1717, %v1756
    %v1758 = vpop.f32.mrf.mxu0
    %v1759 = vpop.f32.mrf.mxu0
    %v1760 = vpop.f32.mrf.mxu0
    %1761 = vdwg.mxu0
    %v1762 = vld [vmem:[#allocation3] sm:$0x1]
    %1764 = vset.pattern.permute.xlu0 0
    %1765 = vperm.xlu0 %1764, %v714
    %v1766 = vpop.permute.xlu0 %1765
    %v1768 = vlaneseq
    %v1769 = vshrl.u32 %v1768, 7
    %v1770 = vsub.s32 0, %v1769
    %v1771 = vrot.slane %v1766, %v1770
    %v1772 = vmul.f32 %v1771, %v1762
    %v1773 = vadd.f32 %v1772, %v1757
    %1774 = vst [vmem:[#allocation3] sm:$0x1] %v1773
    %vm1775 = vcmask 0
    %1776 = vst.msk [vmem:[#allocation4] sm:$0x1] %vm1775, %v711
    // Predicated region
    $region58: #{step.1} parent=1 // pred_check
      %p1777 = pneg %p61
    $region59: #{step.1} parent=1 // pred_check_branch
      %1779 = sbr.rel (%p1777) target = $region61
    $region60: #{step.1} parent=1 // pred_region
      %v1780 = vld [vmem:[#allocation3] sm:$0x1]
      %v1781 = vrcp.pop %v1780
      %v1782 = vmul.f32 1.0, %v1781
      %1784 = vrot.lane.b32.xlu0 %v1782, 1
      %v1785 = vpop.permute.xlu0 %1784
      %v1787 = vmul.f32 %v1780, %v1785
      %1789 = vrot.lane.b32.xlu0 %v1787, 127
      %v1790 = vpop.permute.xlu0 %1789
      %v1792 = vrcp.pop %v1790
      %v1793 = vmul.f32 %v1782, %v1792
      %1794 = vrot.lane.b32.xlu0 %v1782, 2
      %v1795 = vpop.permute.xlu0 %1794
      %v1797 = vmul.f32 %v1780, %v1795
      %1799 = vrot.lane.b32.xlu0 %v1793, 3
      %v1800 = vpop.permute.xlu0 %1799
      %v1802 = vmul.f32 %v1780, %v1800
      %1803 = vset.pattern.permute.xlu0 124
      %1804 = vperm.xlu0 %1803, %v1793
      %v1805 = vpop.permute.xlu0 %1804
      %v1807 = vlaneseq
      %v1808 = vshrl.u32 %v1807, 7
      %v1809 = vsub.s32 0, %v1808
      %v1810 = vrot.slane %v1805, %v1809
      %v1811 = vmul.f32 %v1780, %v1810
      %v1812 = vld [vmem:[%s9] sm:$0x1]
      %vm1813 = vcmp.gt.f32.partialorder %v1812, 0.5
      %v1814 = vmul.f32 %v1797, 0.0001
      %1816 = vset.pattern.permute.xlu0 126
      %1817 = vperm.xlu0 %1816, %v1814
      %v1818 = vpop.permute.xlu0 %1817
      %v1820 = vlaneseq
      %v1821 = vshrl.u32 %v1820, 7
      %v1822 = vsub.s32 0, %v1821
      %v1823 = vrot.slane %v1818, %v1822
      %v1824 = vsel %vm1813, %v1811, %v1823
      %v1825 = vld [vmem:[%s10] sm:$0x1]
      %vm1826 = vcmp.gt.f32.partialorder %v1825, 0.5
      %1828 = vset.pattern.permute.xlu0 127
      %1829 = vperm.xlu0 %1828, %v1802
      %v1830 = vpop.permute.xlu0 %1829
      %v1832 = vlaneseq
      %v1833 = vshrl.u32 %v1832, 7
      %v1834 = vsub.s32 0, %v1833
      %v1835 = vrot.slane %v1830, %v1834
      %v1836 = vsel %vm1826, %v1835, %v1824
      %v1837 = vld [vmem:[%s11] sm:$0x1]
      %vm1838 = vcmp.gt.f32.partialorder %v1837, 0.5
      %v1839 = vsel %vm1838, 1e-10, %v1836
      %v1840 = vmax.f32 %v1839, 1e-10
      %v1841 = vlog2.pop %v1840
      %v1842 = vmul.f32 %v1841, 0.6931472
      %vm1843 = vcmp.lt.f32.partialorder %v1787, 1e-10
      %v1844 = vsel %vm1843, 1, 0
      %1845 = vset.pattern.permute.xlu0 125
      %1846 = vperm.xlu0 %1845, %v1844
      %v1847 = vpop.permute.xlu0 %1846
      %v1848 = vlaneseq
      %v1849 = vshrl.u32 %v1848, 7
      %v1850 = vsub.s32 0, %v1849
      %v1851 = vrot.slane %v1847, %v1850
      %vm1852 = vcmp.eq.s32.totalorder %v1851, 1
      %v1853 = vsel %vm1852, -1e+10, %v1842
      %1854 = vst [vmem:[#allocation11] sm:$0x1] %v1853
    $region61: #{step.1} parent=1 // pred_fallthru
      _
    // Predicated region
    $region62: #{step.1} parent=1 // pred_check
      _
    $region63: #{step.1} parent=1 // pred_check_branch
      %1856 = sbr.rel (0) target = $region65
    $region64: #{step.1} parent=1 // pred_region
      %s1858 = ssub.s32 16, 16
      %1859 = vsyncadd [#allocation7], %s1858
      %s1861 = sshll.u32 [#allocation8], 4
      %s1862 = int_to_ptr.vmem [resolvable:$true] %s1861
      %1864 = dma.vmem_to_hbm [thread:$0]  %s1862, 16, %s12, [#allocation7]
    $region65: #{step.1} parent=1 // pred_fallthru
      _
    // Predicated region
    $region66: #{step.1} parent=1 // pred_check
      _
    $region67: #{step.1} parent=1 // pred_check_branch
      %1866 = sbr.rel (0) target = $region69
    $region68: #{step.1} parent=1 // pred_region
      %s1868 = ssub.s32 128, 128
      %1869 = vsyncadd [#allocation10], %s1868
      %s1871 = sshll.u32 [#allocation9], 4
      %s1872 = int_to_ptr.vmem [resolvable:$true] %s1871
      %1874 = dma.vmem_to_hbm [thread:$0]  %s1872, 128, %s13, [#allocation10]
    $region69: #{step.1} parent=1 // pred_fallthru
      _
    // Predicated region
    $region70: #{step.1} parent=1 // pred_check
      _
    $region71: #{step.1} parent=1 // pred_check_branch
      %1876 = sbr.rel (0) target = $region73
    $region72: #{step.1} parent=1 // pred_region
      %s1878 = ssub.s32 16, 16
      %1879 = vsyncadd [#allocation10], %s1878
      %s1881 = sshll.u32 [#allocation11], 4
      %s1882 = int_to_ptr.vmem [resolvable:$true] %s1881
      %1884 = dma.vmem_to_hbm [thread:$0]  %s1882, 16, %s14, [#allocation10]
    $region73: #{step.1} parent=1 // pred_fallthru
      _
    // Predicated region
    $region74: #{step.1} parent=1 // pred_check
      _
    $region75: #{step.1} parent=1 // pred_check_branch
      %1886 = sbr.rel (0) target = $region77
    $region76: #{step.1} parent=1 // pred_region
      %1887 = dma.done [#allocation7], 16
    $region77: #{step.1} parent=1 // pred_fallthru
      _
    // Predicated region
    $region78: #{step.1} parent=1 // pred_check
      _
    $region79: #{step.1} parent=1 // pred_check_branch
      %1889 = sbr.rel (0) target = $region81
    $region80: #{step.1} parent=1 // pred_region
      %1890 = dma.done [#allocation10], 128
    $region81: #{step.1} parent=1 // pred_fallthru
      _
    // Predicated region
    $region82: #{step.1} parent=1 // pred_check
      _
    $region83: #{step.1} parent=1 // pred_check_branch
      %1892 = sbr.rel (0) target = $region85
    $region84: #{step.1} parent=1 // pred_region
      %1893 = dma.done [#allocation10], 16
    $region85: #{step.1} parent=1 // pred_fallthru
      _
    %1894 = vsyncpa [#allocation6], 1
    %1895 = vsyncpa [#allocation7], 1
    %1896 = vsyncpa [#allocation10], 1

</llo_original>
